<compile_context>
chip_gen: v7x
topology: tpu7x:2x2x1
jax: 0.10.0
libtpu: 0.0.40
codegen_flags: <defaults>
</compile_context>

<pallas_src>
import jax
import jax.numpy as jnp
from jax.experimental import pallas as pl
from jax.experimental.pallas import tpu as pltpu


_INV_SQRT2 = 0.7071067811865476

# Row layout of the packed per-layer vector block (f32, padded to 16 sublanes).
_R_BQ, _R_BK, _R_BV, _R_BO, _R_G1, _R_BE1, _R_B2, _R_G2, _R_BE2 = range(9)
_N_VEC_ROWS = 16


def _gelu_exact(x):
    # PyTorch nn.GELU() default (erf form)
    return 0.5 * x * (1.0 + jax.lax.erf(x * _INV_SQRT2))


def make_encoder_kernel(bs, q_len, d_model, n_heads, d_ff):
    dk = d_model // n_heads
    scale = float(dk) ** -0.5          # _ScaledDotProductAttention.scale (lsa=False)
    eps = 1e-5                         # nn.BatchNorm1d default eps
    n_rows = bs * q_len

    def kernel(src_ref, wqkv_ref, wo_ref, w1_ref, w2_ref, vecs_ref, b1_ref, out_ref):
        l = pl.program_id(0)

        # Seed the VMEM-resident carry once; out_ref's block index is constant so
        # it persists across the whole layer grid (accumulator pattern).
        @pl.when(l == 0)
        def _():
            out_ref[...] = src_ref[...].astype(jnp.float32)

        x = out_ref[...]                                 # (n_rows, d_model) f32 carry
        xb = x.astype(jnp.bfloat16)
        vec = vecs_ref[0]                                # (16, d_model) f32 packed vectors

        # ---- fused Q|K|V projection: one wide bf16 MXU matmul, f32 accumulate ----
        qkv = jnp.dot(xb, wqkv_ref[0], preferred_element_type=jnp.float32)
        q3 = (qkv[:, 0:d_model] + vec[_R_BQ:_R_BQ + 1]
              ).astype(jnp.bfloat16).reshape(bs, q_len, d_model)
        k3 = (qkv[:, d_model:2 * d_model] + vec[_R_BK:_R_BK + 1]
              ).astype(jnp.bfloat16).reshape(bs, q_len, d_model)
        v3 = (qkv[:, 2 * d_model:3 * d_model] + vec[_R_BV:_R_BV + 1]
              ).astype(jnp.bfloat16).reshape(bs, q_len, d_model)

        # ---- scaled dot-product attention: batched over bs, short head loop ----
        head_outs = []
        for h in range(n_heads):
            sl = slice(h * dk, (h + 1) * dk)
            s = jnp.einsum('bqd,bkd->bqk', q3[:, :, sl], k3[:, :, sl],
                           preferred_element_type=jnp.float32) * scale
            s = s - jnp.max(s, axis=-1, keepdims=True)
            e = jnp.exp(s)
            p = e * pl.reciprocal(jnp.sum(e, axis=-1, keepdims=True), approx=True)
            head_outs.append(
                jnp.einsum('bqk,bkd->bqd', p.astype(jnp.bfloat16), v3[:, :, sl],
                           preferred_element_type=jnp.float32))
        attn = jnp.concatenate(head_outs, axis=-1).reshape(n_rows, d_model)

        # ---- output projection + residual + BatchNorm1d (training batch stats) ----
        proj = jnp.dot(attn.astype(jnp.bfloat16), wo_ref[0],
                       preferred_element_type=jnp.float32) + vec[_R_BO:_R_BO + 1]
        s1 = x + proj
        m1 = jnp.mean(s1, axis=0, keepdims=True)
        v1 = jnp.mean((s1 - m1) ** 2, axis=0, keepdims=True)
        n1 = (s1 - m1) * jax.lax.rsqrt(v1 + eps) * vec[_R_G1:_R_G1 + 1] \
            + vec[_R_BE1:_R_BE1 + 1]

        # ---- position-wise feed-forward with exact GELU (matches nn.GELU) ----
        h1 = jnp.dot(n1.astype(jnp.bfloat16), w1_ref[0],
                     preferred_element_type=jnp.float32) + b1_ref[0]
        h1 = _gelu_exact(h1)
        ff = jnp.dot(h1.astype(jnp.bfloat16), w2_ref[0],
                     preferred_element_type=jnp.float32) + vec[_R_B2:_R_B2 + 1]

        # ---- residual + BatchNorm1d ----
        s2 = n1 + ff
        m2 = jnp.mean(s2, axis=0, keepdims=True)
        v2 = jnp.mean((s2 - m2) ** 2, axis=0, keepdims=True)
        n2 = (s2 - m2) * jax.lax.rsqrt(v2 + eps) * vec[_R_G2:_R_G2 + 1] \
            + vec[_R_BE2:_R_BE2 + 1]

        out_ref[...] = n2                                # carry to next layer / output

    return kernel


def tst_encoder_pallas(src, packed_params, n_heads, d_ff, n_layers):
    bs, q_len, d_model = src.shape
    n_rows = bs * q_len
    src2 = src.reshape(n_rows, d_model).astype(jnp.float32)   # lane-dense 2-D layout

    wqkv, wo, w1, w2, vecs, b1 = packed_params
    kernel = make_encoder_kernel(bs, q_len, d_model, n_heads, d_ff)

    def layer_block(arr):
        return pl.BlockSpec((1,) + arr.shape[1:], lambda l: (l, 0, 0))

    in_specs = [pl.BlockSpec((n_rows, d_model), lambda l: (0, 0))]
    in_specs += [layer_block(p) for p in (wqkv, wo, w1, w2, vecs, b1)]
    out_specs = pl.BlockSpec((n_rows, d_model), lambda l: (0, 0))

    # Rough VMEM budget: f32 activations/intermediates + double-buffered weights,
    # capped below the physical per-core VMEM of the current TPU generation.
    act_bytes = 4 * (n_rows * (12 * d_model + 3 * d_ff) + 6 * bs * q_len * q_len)
    per_layer_w_bytes = (2 * (3 * d_model * d_model + d_model * d_model
                              + 2 * d_model * d_ff)
                         + 4 * (_N_VEC_ROWS * d_model + d_ff))
    vmem_est = 2 * act_bytes + 2 * 2 * per_layer_w_bytes
    try:
        vmem_cap = int(pltpu.get_tpu_info().vmem_capacity_bytes)
    except Exception:
        vmem_cap = 64 * 1024 * 1024          # conservative: v7x per-TensorCore VMEM
    vmem_limit = int(min(int(0.75 * vmem_cap), max(32 * 1024 * 1024, vmem_est)))

    out2 = pl.pallas_call(
        kernel,
        out_shape=jax.ShapeDtypeStruct((n_rows, d_model), jnp.float32),
        grid_spec=pltpu.PrefetchScalarGridSpec(
            num_scalar_prefetch=0,
            grid=(n_layers,),
            in_specs=in_specs,
            out_specs=out_specs,
        ),
        compiler_params=pltpu.CompilerParams(
            dimension_semantics=("arbitrary",),      # layers are sequential
            vmem_limit_bytes=vmem_limit,
        ),
    )(src2, wqkv, wo, w1, w2, vecs, b1)
    return out2.reshape(bs, q_len, d_model)


# ---------------- parameter construction (deterministic, no key reuse) ----------------
def init_layer_params(key, d_model, d_ff):
    ks = jax.random.split(key, 16)

    def w(k, shape, s=0.05):
        return (s * jax.random.normal(k, shape)).astype(jnp.float32)

    return dict(
        wq=w(ks[0], (d_model, d_model)), bq=w(ks[1], (d_model,), 0.01),
        wk=w(ks[2], (d_model, d_model)), bk=w(ks[3], (d_model,), 0.01),
        wv=w(ks[4], (d_model, d_model)), bv=w(ks[5], (d_model,), 0.01),
        wo=w(ks[6], (d_model, d_model)), bo=w(ks[7], (d_model,), 0.01),
        g1=1.0 + w(ks[8], (d_model,), 0.02), be1=w(ks[9], (d_model,), 0.02),
        w1=w(ks[10], (d_model, d_ff)), b1=w(ks[11], (d_ff,), 0.01),
        w2=w(ks[12], (d_ff, d_model)), b2=w(ks[13], (d_model,), 0.01),
        g2=1.0 + w(ks[14], (d_model,), 0.02), be2=w(ks[15], (d_model,), 0.02),
    )


def pack_params(layers, d_model, d_ff):
    """Stack per-layer params on a leading layer axis; fuse QKV; pack small vectors."""
    wqkv = jnp.stack([jnp.concatenate([p['wq'], p['wk'], p['wv']], axis=1)
                      for p in layers]).astype(jnp.bfloat16)
    wo = jnp.stack([p['wo'] for p in layers]).astype(jnp.bfloat16)
    w1 = jnp.stack([p['w1'] for p in layers]).astype(jnp.bfloat16)
    w2 = jnp.stack([p['w2'] for p in layers]).astype(jnp.bfloat16)

    def vec_block(p):
        rows = jnp.stack([p['bq'], p['bk'], p['bv'], p['bo'],
                          p['g1'], p['be1'], p['b2'], p['g2'], p['be2']], axis=0)
        pad = jnp.zeros((_N_VEC_ROWS - rows.shape[0], d_model), jnp.float32)
        return jnp.concatenate([rows, pad], axis=0)

    vecs = jnp.stack([vec_block(p) for p in layers]).astype(jnp.float32)
    b1 = jnp.stack([p['b1'].reshape(1, d_ff) for p in layers]).astype(jnp.float32)
    return (wqkv, wo, w1, w2, vecs, b1)


# ------------- pure-JAX reference (same math, same bf16 matmul cast points) -------------
def reference_encoder(src, layers, n_heads):
    bs, q_len, d_model = src.shape
    dk = d_model // n_heads
    scale = float(dk) ** -0.5
    eps = 1e-5
    bf = lambda a: a.astype(jnp.bfloat16)
    mm = lambda a, b: jnp.dot(bf(a), bf(b), preferred_element_type=jnp.float32)

    x = src.reshape(bs * q_len, d_model).astype(jnp.float32)
    for p in layers:
        q = (mm(x, p['wq']) + p['bq']).reshape(bs, q_len, n_heads, dk)
        k = (mm(x, p['wk']) + p['bk']).reshape(bs, q_len, n_heads, dk)
        v = (mm(x, p['wv']) + p['bv']).reshape(bs, q_len, n_heads, dk)
        s = jnp.einsum('bqhd,bkhd->bhqk', bf(q), bf(k),
                       preferred_element_type=jnp.float32) * scale
        a = jax.nn.softmax(s, axis=-1)
        o = jnp.einsum('bhqk,bkhd->bqhd', bf(a), bf(v),
                       preferred_element_type=jnp.float32).reshape(bs * q_len, d_model)
        s1 = x + mm(o, p['wo']) + p['bo']
        m1 = s1.mean(0, keepdims=True); v1 = ((s1 - m1) ** 2).mean(0, keepdims=True)
        n1 = (s1 - m1) / jnp.sqrt(v1 + eps) * p['g1'] + p['be1']
        h = mm(n1, p['w1']) + p['b1']
        h = 0.5 * h * (1.0 + jax.lax.erf(h * _INV_SQRT2))
        ff = mm(h, p['w2']) + p['b2']
        s2 = n1 + ff
        m2 = s2.mean(0, keepdims=True); v2 = ((s2 - m2) ** 2).mean(0, keepdims=True)
        x = (s2 - m2) / jnp.sqrt(v2 + eps) * p['g2'] + p['be2']
    return x.reshape(bs, q_len, d_model)


if __name__ == "__main__":
    bs, q_len, d_model, n_heads, d_ff, n_layers = 2, 16, 32, 4, 64, 2

    key = jax.random.PRNGKey(0)
    k_src, *k_layers = jax.random.split(key, n_layers + 1)
    src = jax.random.normal(k_src, (bs, q_len, d_model), dtype=jnp.float32)
    layers = [init_layer_params(k, d_model, d_ff) for k in k_layers]
    packed = pack_params(layers, d_model, d_ff)

    out = jax.block_until_ready(tst_encoder_pallas(src, packed, n_heads, d_ff, n_layers))
    ref = jax.block_until_ready(reference_encoder(src, layers, n_heads))

    assert out.shape == (bs, q_len, d_model)
    max_err = float(jnp.max(jnp.abs(out - ref)))
    assert jnp.allclose(out, ref, atol=1e-2, rtol=1e-2), \
        f"mismatch vs reference, max abs err={max_err}"
    print("KERNEL_OK")
</pallas_src>

<mosaic_0001>
module attributes {stable_mosaic.version = 11 : i64} {
  func.func @kernel(%arg0: i32, %arg1: memref<32x32xf32, #tpu.memory_space<vmem>>, %arg2: memref<1x32x96xbf16, #tpu.memory_space<vmem>>, %arg3: memref<1x32x32xbf16, #tpu.memory_space<vmem>>, %arg4: memref<1x32x64xbf16, #tpu.memory_space<vmem>>, %arg5: memref<1x64x32xbf16, #tpu.memory_space<vmem>>, %arg6: memref<1x16x32xf32, #tpu.memory_space<vmem>>, %arg7: memref<1x1x64xf32, #tpu.memory_space<vmem>>, %arg8: memref<32x32xf32, #tpu.memory_space<vmem>>) attributes {dimension_semantics = [#tpu.dimension_semantics<arbitrary>], iteration_bounds = array<i64: 2>, scalar_prefetch = 0 : i64, scratch_operands = 0 : i64, tpu.core_type = #tpu.core_type<tc>, window_params = [{pipeline_mode = #tpu.pipeline_mode<synchronous>, transform_indices = @transform_0, window_bounds = array<i64: 32, 32>}, {transform_indices = @transform_1, window_bounds = array<i64: 1, 32, 96>}, {transform_indices = @transform_2, window_bounds = array<i64: 1, 32, 32>}, {transform_indices = @transform_3, window_bounds = array<i64: 1, 32, 64>}, {transform_indices = @transform_4, window_bounds = array<i64: 1, 64, 32>}, {transform_indices = @transform_5, window_bounds = array<i64: 1, 16, 32>}, {transform_indices = @transform_6, window_bounds = array<i64: 1, 1, 64>}, {pipeline_mode = #tpu.pipeline_mode<synchronous>, transform_indices = @transform_7, window_bounds = array<i64: 32, 32>}]} {
    %c0_i32 = arith.constant 0 : i32
    %0 = arith.cmpi eq, %arg0, %c0_i32 : i32
    %1 = arith.extui %0 : i1 to i32
    %c0_i32_0 = arith.constant 0 : i32
    %2 = arith.cmpi ne, %1, %c0_i32_0 : i32
    scf.if %2 {
      %c0_58 = arith.constant 0 : index
      %c0_59 = arith.constant 0 : index
      %183 = vector.load %arg1[%c0_58, %c0_59] : memref<32x32xf32, #tpu.memory_space<vmem>>, vector<32x32xf32>
      %c0_60 = arith.constant 0 : index
      %c0_61 = arith.constant 0 : index
      %184 = vector.load %arg8[%c0_60, %c0_61] : memref<32x32xf32, #tpu.memory_space<vmem>>, vector<32x32xf32>
      tpu.vector_store %arg8[%c0_60, %c0_61], %183 {strides = array<i32>} : memref<32x32xf32, #tpu.memory_space<vmem>>, vector<32x32xf32>,
    } else {
    }
    %c0 = arith.constant 0 : index
    %c0_1 = arith.constant 0 : index
    %3 = vector.load %arg8[%c0, %c0_1] : memref<32x32xf32, #tpu.memory_space<vmem>>, vector<32x32xf32>
    %4 = arith.truncf %3 : vector<32x32xf32> to vector<32x32xbf16>
    %c0_2 = arith.constant 0 : index
    %c0_3 = arith.constant 0 : index
    %c0_4 = arith.constant 0 : index
    %5 = vector.load %arg6[%c0_2, %c0_3, %c0_4] : memref<1x16x32xf32, #tpu.memory_space<vmem>>, vector<1x16x32xf32>
    %6 = vector.shape_cast %5 : vector<1x16x32xf32> to vector<16x32xf32>
    %c0_5 = arith.constant 0 : index
    %c0_6 = arith.constant 0 : index
    %c0_7 = arith.constant 0 : index
    %7 = vector.load %arg2[%c0_5, %c0_6, %c0_7] : memref<1x32x96xbf16, #tpu.memory_space<vmem>>, vector<1x32x96xbf16>
    %8 = vector.shape_cast %7 : vector<1x32x96xbf16> to vector<32x96xbf16>
    %cst = arith.constant dense<0.000000e+00> : vector<32x96xf32>
    %9 = tpu.matmul %4, %8, %cst {dimension_numbers = #tpu.dot_dimension_numbers<[1], [0], [0], [1], [0, 0, 1, 1], [], []>} : vector<32x32xbf16>, vector<32x96xbf16>, vector<32x96xf32> -> vector<32x96xf32>
    %10 = vector.extract_strided_slice %9 {offsets = [0, 0], sizes = [32, 32], strides = [1, 1]} : vector<32x96xf32> to vector<32x32xf32>
    %11 = vector.extract_strided_slice %6 {offsets = [0, 0], sizes = [1, 32], strides = [1, 1]} : vector<16x32xf32> to vector<1x32xf32>
    %12 = vector.broadcast %11 : vector<1x32xf32> to vector<32x32xf32>
    %13 = arith.addf %10, %12 : vector<32x32xf32>
    %14 = arith.truncf %13 : vector<32x32xf32> to vector<32x32xbf16>
    %15 = vector.shape_cast %14 : vector<32x32xbf16> to vector<2x16x32xbf16>
    %16 = vector.extract_strided_slice %9 {offsets = [0, 32], sizes = [32, 32], strides = [1, 1]} : vector<32x96xf32> to vector<32x32xf32>
    %17 = vector.extract_strided_slice %6 {offsets = [1, 0], sizes = [1, 32], strides = [1, 1]} : vector<16x32xf32> to vector<1x32xf32>
    %18 = vector.broadcast %17 : vector<1x32xf32> to vector<32x32xf32>
    %19 = arith.addf %16, %18 : vector<32x32xf32>
    %20 = arith.truncf %19 : vector<32x32xf32> to vector<32x32xbf16>
    %21 = vector.shape_cast %20 : vector<32x32xbf16> to vector<2x16x32xbf16>
    %22 = vector.extract_strided_slice %9 {offsets = [0, 64], sizes = [32, 32], strides = [1, 1]} : vector<32x96xf32> to vector<32x32xf32>
    %23 = vector.extract_strided_slice %6 {offsets = [2, 0], sizes = [1, 32], strides = [1, 1]} : vector<16x32xf32> to vector<1x32xf32>
    %24 = vector.broadcast %23 : vector<1x32xf32> to vector<32x32xf32>
    %25 = arith.addf %22, %24 : vector<32x32xf32>
    %26 = arith.truncf %25 : vector<32x32xf32> to vector<32x32xbf16>
    %27 = vector.shape_cast %26 : vector<32x32xbf16> to vector<2x16x32xbf16>
    %28 = vector.extract_strided_slice %15 {offsets = [0, 0, 0], sizes = [2, 16, 8], strides = [1, 1, 1]} : vector<2x16x32xbf16> to vector<2x16x8xbf16>
    %29 = vector.extract_strided_slice %21 {offsets = [0, 0, 0], sizes = [2, 16, 8], strides = [1, 1, 1]} : vector<2x16x32xbf16> to vector<2x16x8xbf16>
    "tpu.trace_start"() <{level = 10 : i32, message = "bqd,bkd->bqk"}> : () -> ()
    %cst_8 = arith.constant dense<0.000000e+00> : vector<2x16x16xf32>
    %30 = tpu.matmul %28, %29, %cst_8 {dimension_numbers = #tpu.dot_dimension_numbers<[2], [2], [1], [1], [0, 0, 0, 1, 1, 1], [0], [0]>} : vector<2x16x8xbf16>, vector<2x16x8xbf16>, vector<2x16x16xf32> -> vector<2x16x16xf32>
    "tpu.trace_stop"() : () -> ()
    %cst_9 = arith.constant 0.353553385 : f32
    %31 = vector.broadcast %cst_9 : f32 to vector<2x16x16xf32>
    %32 = arith.mulf %30, %31 : vector<2x16x16xf32>
    %cst_10 = arith.constant dense<0xFF800000> : vector<2x16xf32>
    %33 = vector.multi_reduction <maximumf>, %32, %cst_10 [2] : vector<2x16x16xf32> to vector<2x16xf32>
    %34 = vector.shape_cast %33 : vector<2x16xf32> to vector<2x16x1xf32>
    %35 = vector.broadcast %34 : vector<2x16x1xf32> to vector<2x16x16xf32>
    %36 = arith.subf %32, %35 : vector<2x16x16xf32>
    %37 = math.exp %36 : vector<2x16x16xf32>
    %cst_11 = arith.constant dense<0.000000e+00> : vector<2x16xf32>
    %38 = vector.multi_reduction <add>, %37, %cst_11 [2] : vector<2x16x16xf32> to vector<2x16xf32>
    %39 = vector.shape_cast %38 : vector<2x16xf32> to vector<2x16x1xf32>
    %40 = tpu.reciprocal %39 {approx = true} : vector<2x16x1xf32> -> vector<2x16x1xf32>
    %41 = vector.broadcast %40 : vector<2x16x1xf32> to vector<2x16x16xf32>
    %42 = arith.mulf %37, %41 : vector<2x16x16xf32>
    %43 = arith.truncf %42 : vector<2x16x16xf32> to vector<2x16x16xbf16>
    %44 = vector.extract_strided_slice %27 {offsets = [0, 0, 0], sizes = [2, 16, 8], strides = [1, 1, 1]} : vector<2x16x32xbf16> to vector<2x16x8xbf16>
    "tpu.trace_start"() <{level = 10 : i32, message = "bqk,bkd->bqd"}> : () -> ()
    %cst_12 = arith.constant dense<0.000000e+00> : vector<2x16x8xf32>
    %45 = tpu.matmul %43, %44, %cst_12 {dimension_numbers = #tpu.dot_dimension_numbers<[2], [1], [1], [2], [0, 0, 0, 1, 1, 2], [0], [0]>} : vector<2x16x16xbf16>, vector<2x16x8xbf16>, vector<2x16x8xf32> -> vector<2x16x8xf32>
    "tpu.trace_stop"() : () -> ()
    %46 = vector.extract_strided_slice %15 {offsets = [0, 0, 8], sizes = [2, 16, 8], strides = [1, 1, 1]} : vector<2x16x32xbf16> to vector<2x16x8xbf16>
    %47 = vector.extract_strided_slice %21 {offsets = [0, 0, 8], sizes = [2, 16, 8], strides = [1, 1, 1]} : vector<2x16x32xbf16> to vector<2x16x8xbf16>
    "tpu.trace_start"() <{level = 10 : i32, message = "bqd,bkd->bqk"}> : () -> ()
    %cst_13 = arith.constant dense<0.000000e+00> : vector<2x16x16xf32>
    %48 = tpu.matmul %46, %47, %cst_13 {dimension_numbers = #tpu.dot_dimension_numbers<[2], [2], [1], [1], [0, 0, 0, 1, 1, 1], [0], [0]>} : vector<2x16x8xbf16>, vector<2x16x8xbf16>, vector<2x16x16xf32> -> vector<2x16x16xf32>
    "tpu.trace_stop"() : () -> ()
    %cst_14 = arith.constant 0.353553385 : f32
    %49 = vector.broadcast %cst_14 : f32 to vector<2x16x16xf32>
    %50 = arith.mulf %48, %49 : vector<2x16x16xf32>
    %cst_15 = arith.constant dense<0xFF800000> : vector<2x16xf32>
    %51 = vector.multi_reduction <maximumf>, %50, %cst_15 [2] : vector<2x16x16xf32> to vector<2x16xf32>
    %52 = vector.shape_cast %51 : vector<2x16xf32> to vector<2x16x1xf32>
    %53 = vector.broadcast %52 : vector<2x16x1xf32> to vector<2x16x16xf32>
    %54 = arith.subf %50, %53 : vector<2x16x16xf32>
    %55 = math.exp %54 : vector<2x16x16xf32>
    %cst_16 = arith.constant dense<0.000000e+00> : vector<2x16xf32>
    %56 = vector.multi_reduction <add>, %55, %cst_16 [2] : vector<2x16x16xf32> to vector<2x16xf32>
    %57 = vector.shape_cast %56 : vector<2x16xf32> to vector<2x16x1xf32>
    %58 = tpu.reciprocal %57 {approx = true} : vector<2x16x1xf32> -> vector<2x16x1xf32>
    %59 = vector.broadcast %58 : vector<2x16x1xf32> to vector<2x16x16xf32>
    %60 = arith.mulf %55, %59 : vector<2x16x16xf32>
    %61 = arith.truncf %60 : vector<2x16x16xf32> to vector<2x16x16xbf16>
    %62 = vector.extract_strided_slice %27 {offsets = [0, 0, 8], sizes = [2, 16, 8], strides = [1, 1, 1]} : vector<2x16x32xbf16> to vector<2x16x8xbf16>
    "tpu.trace_start"() <{level = 10 : i32, message = "bqk,bkd->bqd"}> : () -> ()
    %cst_17 = arith.constant dense<0.000000e+00> : vector<2x16x8xf32>
    %63 = tpu.matmul %61, %62, %cst_17 {dimension_numbers = #tpu.dot_dimension_numbers<[2], [1], [1], [2], [0, 0, 0, 1, 1, 2], [0], [0]>} : vector<2x16x16xbf16>, vector<2x16x8xbf16>, vector<2x16x8xf32> -> vector<2x16x8xf32>
    "tpu.trace_stop"() : () -> ()
    %64 = vector.extract_strided_slice %15 {offsets = [0, 0, 16], sizes = [2, 16, 8], strides = [1, 1, 1]} : vector<2x16x32xbf16> to vector<2x16x8xbf16>
    %65 = vector.extract_strided_slice %21 {offsets = [0, 0, 16], sizes = [2, 16, 8], strides = [1, 1, 1]} : vector<2x16x32xbf16> to vector<2x16x8xbf16>
    "tpu.trace_start"() <{level = 10 : i32, message = "bqd,bkd->bqk"}> : () -> ()
    %cst_18 = arith.constant dense<0.000000e+00> : vector<2x16x16xf32>
    %66 = tpu.matmul %64, %65, %cst_18 {dimension_numbers = #tpu.dot_dimension_numbers<[2], [2], [1], [1], [0, 0, 0, 1, 1, 1], [0], [0]>} : vector<2x16x8xbf16>, vector<2x16x8xbf16>, vector<2x16x16xf32> -> vector<2x16x16xf32>
    "tpu.trace_stop"() : () -> ()
    %cst_19 = arith.constant 0.353553385 : f32
    %67 = vector.broadcast %cst_19 : f32 to vector<2x16x16xf32>
    %68 = arith.mulf %66, %67 : vector<2x16x16xf32>
    %cst_20 = arith.constant dense<0xFF800000> : vector<2x16xf32>
    %69 = vector.multi_reduction <maximumf>, %68, %cst_20 [2] : vector<2x16x16xf32> to vector<2x16xf32>
    %70 = vector.shape_cast %69 : vector<2x16xf32> to vector<2x16x1xf32>
    %71 = vector.broadcast %70 : vector<2x16x1xf32> to vector<2x16x16xf32>
    %72 = arith.subf %68, %71 : vector<2x16x16xf32>
    %73 = math.exp %72 : vector<2x16x16xf32>
    %cst_21 = arith.constant dense<0.000000e+00> : vector<2x16xf32>
    %74 = vector.multi_reduction <add>, %73, %cst_21 [2] : vector<2x16x16xf32> to vector<2x16xf32>
    %75 = vector.shape_cast %74 : vector<2x16xf32> to vector<2x16x1xf32>
    %76 = tpu.reciprocal %75 {approx = true} : vector<2x16x1xf32> -> vector<2x16x1xf32>
    %77 = vector.broadcast %76 : vector<2x16x1xf32> to vector<2x16x16xf32>
    %78 = arith.mulf %73, %77 : vector<2x16x16xf32>
    %79 = arith.truncf %78 : vector<2x16x16xf32> to vector<2x16x16xbf16>
    %80 = vector.extract_strided_slice %27 {offsets = [0, 0, 16], sizes = [2, 16, 8], strides = [1, 1, 1]} : vector<2x16x32xbf16> to vector<2x16x8xbf16>
    "tpu.trace_start"() <{level = 10 : i32, message = "bqk,bkd->bqd"}> : () -> ()
    %cst_22 = arith.constant dense<0.000000e+00> : vector<2x16x8xf32>
    %81 = tpu.matmul %79, %80, %cst_22 {dimension_numbers = #tpu.dot_dimension_numbers<[2], [1], [1], [2], [0, 0, 0, 1, 1, 2], [0], [0]>} : vector<2x16x16xbf16>, vector<2x16x8xbf16>, vector<2x16x8xf32> -> vector<2x16x8xf32>
    "tpu.trace_stop"() : () -> ()
    %82 = vector.extract_strided_slice %15 {offsets = [0, 0, 24], sizes = [2, 16, 8], strides = [1, 1, 1]} : vector<2x16x32xbf16> to vector<2x16x8xbf16>
    %83 = vector.extract_strided_slice %21 {offsets = [0, 0, 24], sizes = [2, 16, 8], strides = [1, 1, 1]} : vector<2x16x32xbf16> to vector<2x16x8xbf16>
    "tpu.trace_start"() <{level = 10 : i32, message = "bqd,bkd->bqk"}> : () -> ()
    %cst_23 = arith.constant dense<0.000000e+00> : vector<2x16x16xf32>
    %84 = tpu.matmul %82, %83, %cst_23 {dimension_numbers = #tpu.dot_dimension_numbers<[2], [2], [1], [1], [0, 0, 0, 1, 1, 1], [0], [0]>} : vector<2x16x8xbf16>, vector<2x16x8xbf16>, vector<2x16x16xf32> -> vector<2x16x16xf32>
    "tpu.trace_stop"() : () -> ()
    %cst_24 = arith.constant 0.353553385 : f32
    %85 = vector.broadcast %cst_24 : f32 to vector<2x16x16xf32>
    %86 = arith.mulf %84, %85 : vector<2x16x16xf32>
    %cst_25 = arith.constant dense<0xFF800000> : vector<2x16xf32>
    %87 = vector.multi_reduction <maximumf>, %86, %cst_25 [2] : vector<2x16x16xf32> to vector<2x16xf32>
    %88 = vector.shape_cast %87 : vector<2x16xf32> to vector<2x16x1xf32>
    %89 = vector.broadcast %88 : vector<2x16x1xf32> to vector<2x16x16xf32>
    %90 = arith.subf %86, %89 : vector<2x16x16xf32>
    %91 = math.exp %90 : vector<2x16x16xf32>
    %cst_26 = arith.constant dense<0.000000e+00> : vector<2x16xf32>
    %92 = vector.multi_reduction <add>, %91, %cst_26 [2] : vector<2x16x16xf32> to vector<2x16xf32>
    %93 = vector.shape_cast %92 : vector<2x16xf32> to vector<2x16x1xf32>
    %94 = tpu.reciprocal %93 {approx = true} : vector<2x16x1xf32> -> vector<2x16x1xf32>
    %95 = vector.broadcast %94 : vector<2x16x1xf32> to vector<2x16x16xf32>
    %96 = arith.mulf %91, %95 : vector<2x16x16xf32>
    %97 = arith.truncf %96 : vector<2x16x16xf32> to vector<2x16x16xbf16>
    %98 = vector.extract_strided_slice %27 {offsets = [0, 0, 24], sizes = [2, 16, 8], strides = [1, 1, 1]} : vector<2x16x32xbf16> to vector<2x16x8xbf16>
    "tpu.trace_start"() <{level = 10 : i32, message = "bqk,bkd->bqd"}> : () -> ()
    %cst_27 = arith.constant dense<0.000000e+00> : vector<2x16x8xf32>
    %99 = tpu.matmul %97, %98, %cst_27 {dimension_numbers = #tpu.dot_dimension_numbers<[2], [1], [1], [2], [0, 0, 0, 1, 1, 2], [0], [0]>} : vector<2x16x16xbf16>, vector<2x16x8xbf16>, vector<2x16x8xf32> -> vector<2x16x8xf32>
    "tpu.trace_stop"() : () -> ()
    %100 = tpu.concatenate %45, %63, %81, %99 in 2 : vector<2x16x8xf32>, vector<2x16x8xf32>, vector<2x16x8xf32>, vector<2x16x8xf32> -> vector<2x16x32xf32>
    %101 = vector.shape_cast %100 : vector<2x16x32xf32> to vector<32x32xf32>
    %102 = arith.truncf %101 : vector<32x32xf32> to vector<32x32xbf16>
    %c0_28 = arith.constant 0 : index
    %c0_29 = arith.constant 0 : index
    %c0_30 = arith.constant 0 : index
    %103 = vector.load %arg3[%c0_28, %c0_29, %c0_30] : memref<1x32x32xbf16, #tpu.memory_space<vmem>>, vector<1x32x32xbf16>
    %104 = vector.shape_cast %103 : vector<1x32x32xbf16> to vector<32x32xbf16>
    %cst_31 = arith.constant dense<0.000000e+00> : vector<32x32xf32>
    %105 = tpu.matmul %102, %104, %cst_31 {dimension_numbers = #tpu.dot_dimension_numbers<[1], [0], [0], [1], [0, 0, 1, 1], [], []>} : vector<32x32xbf16>, vector<32x32xbf16>, vector<32x32xf32> -> vector<32x32xf32>
    %106 = vector.extract_strided_slice %6 {offsets = [3, 0], sizes = [1, 32], strides = [1, 1]} : vector<16x32xf32> to vector<1x32xf32>
    %107 = vector.broadcast %106 : vector<1x32xf32> to vector<32x32xf32>
    %108 = arith.addf %105, %107 : vector<32x32xf32>
    %109 = arith.addf %3, %108 : vector<32x32xf32>
    %cst_32 = arith.constant dense<0.000000e+00> : vector<32xf32>
    %110 = vector.multi_reduction <add>, %109, %cst_32 [0] : vector<32x32xf32> to vector<32xf32>
    %111 = vector.shape_cast %110 : vector<32xf32> to vector<1x32xf32>
    %cst_33 = arith.constant 3.200000e+01 : f32
    %112 = vector.broadcast %cst_33 : f32 to vector<1x32xf32>
    %113 = arith.divf %111, %112 : vector<1x32xf32>
    %114 = vector.broadcast %113 : vector<1x32xf32> to vector<32x32xf32>
    %115 = arith.subf %109, %114 : vector<32x32xf32>
    %116 = arith.mulf %115, %115 : vector<32x32xf32>
    %cst_34 = arith.constant dense<0.000000e+00> : vector<32xf32>
    %117 = vector.multi_reduction <add>, %116, %cst_34 [0] : vector<32x32xf32> to vector<32xf32>
    %118 = vector.shape_cast %117 : vector<32xf32> to vector<1x32xf32>
    %cst_35 = arith.constant 3.200000e+01 : f32
    %119 = vector.broadcast %cst_35 : f32 to vector<1x32xf32>
    %120 = arith.divf %118, %119 : vector<1x32xf32>
    %121 = vector.broadcast %113 : vector<1x32xf32> to vector<32x32xf32>
    %122 = arith.subf %109, %121 : vector<32x32xf32>
    %cst_36 = arith.constant 9.99999974E-6 : f32
    %123 = vector.broadcast %cst_36 : f32 to vector<1x32xf32>
    %124 = arith.addf %120, %123 : vector<1x32xf32>
    %125 = math.rsqrt %124 : vector<1x32xf32>
    %126 = vector.broadcast %125 : vector<1x32xf32> to vector<32x32xf32>
    %127 = arith.mulf %122, %126 : vector<32x32xf32>
    %128 = vector.extract_strided_slice %6 {offsets = [4, 0], sizes = [1, 32], strides = [1, 1]} : vector<16x32xf32> to vector<1x32xf32>
    %129 = vector.broadcast %128 : vector<1x32xf32> to vector<32x32xf32>
    %130 = arith.mulf %127, %129 : vector<32x32xf32>
    %131 = vector.extract_strided_slice %6 {offsets = [5, 0], sizes = [1, 32], strides = [1, 1]} : vector<16x32xf32> to vector<1x32xf32>
    %132 = vector.broadcast %131 : vector<1x32xf32> to vector<32x32xf32>
    %133 = arith.addf %130, %132 : vector<32x32xf32>
    %134 = arith.truncf %133 : vector<32x32xf32> to vector<32x32xbf16>
    %c0_37 = arith.constant 0 : index
    %c0_38 = arith.constant 0 : index
    %c0_39 = arith.constant 0 : index
    %135 = vector.load %arg4[%c0_37, %c0_38, %c0_39] : memref<1x32x64xbf16, #tpu.memory_space<vmem>>, vector<1x32x64xbf16>
    %136 = vector.shape_cast %135 : vector<1x32x64xbf16> to vector<32x64xbf16>
    %cst_40 = arith.constant dense<0.000000e+00> : vector<32x64xf32>
    %137 = tpu.matmul %134, %136, %cst_40 {dimension_numbers = #tpu.dot_dimension_numbers<[1], [0], [0], [1], [0, 0, 1, 1], [], []>} : vector<32x32xbf16>, vector<32x64xbf16>, vector<32x64xf32> -> vector<32x64xf32>
    %c0_41 = arith.constant 0 : index
    %c0_42 = arith.constant 0 : index
    %c0_43 = arith.constant 0 : index
    %138 = vector.load %arg7[%c0_41, %c0_42, %c0_43] : memref<1x1x64xf32, #tpu.memory_space<vmem>>, vector<1x1x64xf32>
    %139 = vector.shape_cast %138 : vector<1x1x64xf32> to vector<1x64xf32>
    %140 = vector.broadcast %139 : vector<1x64xf32> to vector<32x64xf32>
    %141 = arith.addf %137, %140 : vector<32x64xf32>
    %cst_44 = arith.constant 5.000000e-01 : f32
    %142 = vector.broadcast %cst_44 : f32 to vector<32x64xf32>
    %143 = arith.mulf %142, %141 : vector<32x64xf32>
    %cst_45 = arith.constant 0.707106769 : f32
    %144 = vector.broadcast %cst_45 : f32 to vector<32x64xf32>
    %145 = arith.mulf %141, %144 : vector<32x64xf32>
    %146 = math.erf %145 : vector<32x64xf32>
    %cst_46 = arith.constant 1.000000e+00 : f32
    %147 = vector.broadcast %cst_46 : f32 to vector<32x64xf32>
    %148 = arith.addf %147, %146 : vector<32x64xf32>
    %149 = arith.mulf %143, %148 : vector<32x64xf32>
    %150 = arith.truncf %149 : vector<32x64xf32> to vector<32x64xbf16>
    %c0_47 = arith.constant 0 : index
    %c0_48 = arith.constant 0 : index
    %c0_49 = arith.constant 0 : index
    %151 = vector.load %arg5[%c0_47, %c0_48, %c0_49] : memref<1x64x32xbf16, #tpu.memory_space<vmem>>, vector<1x64x32xbf16>
    %152 = vector.shape_cast %151 : vector<1x64x32xbf16> to vector<64x32xbf16>
    %cst_50 = arith.constant dense<0.000000e+00> : vector<32x32xf32>
    %153 = tpu.matmul %150, %152, %cst_50 {dimension_numbers = #tpu.dot_dimension_numbers<[1], [0], [0], [1], [0, 0, 1, 1], [], []>} : vector<32x64xbf16>, vector<64x32xbf16>, vector<32x32xf32> -> vector<32x32xf32>
    %154 = vector.extract_strided_slice %6 {offsets = [6, 0], sizes = [1, 32], strides = [1, 1]} : vector<16x32xf32> to vector<1x32xf32>
    %155 = vector.broadcast %154 : vector<1x32xf32> to vector<32x32xf32>
    %156 = arith.addf %153, %155 : vector<32x32xf32>
    %157 = arith.addf %133, %156 : vector<32x32xf32>
    %cst_51 = arith.constant dense<0.000000e+00> : vector<32xf32>
    %158 = vector.multi_reduction <add>, %157, %cst_51 [0] : vector<32x32xf32> to vector<32xf32>
    %159 = vector.shape_cast %158 : vector<32xf32> to vector<1x32xf32>
    %cst_52 = arith.constant 3.200000e+01 : f32
    %160 = vector.broadcast %cst_52 : f32 to vector<1x32xf32>
    %161 = arith.divf %159, %160 : vector<1x32xf32>
    %162 = vector.broadcast %161 : vector<1x32xf32> to vector<32x32xf32>
    %163 = arith.subf %157, %162 : vector<32x32xf32>
    %164 = arith.mulf %163, %163 : vector<32x32xf32>
    %cst_53 = arith.constant dense<0.000000e+00> : vector<32xf32>
    %165 = vector.multi_reduction <add>, %164, %cst_53 [0] : vector<32x32xf32> to vector<32xf32>
    %166 = vector.shape_cast %165 : vector<32xf32> to vector<1x32xf32>
    %cst_54 = arith.constant 3.200000e+01 : f32
    %167 = vector.broadcast %cst_54 : f32 to vector<1x32xf32>
    %168 = arith.divf %166, %167 : vector<1x32xf32>
    %169 = vector.broadcast %161 : vector<1x32xf32> to vector<32x32xf32>
    %170 = arith.subf %157, %169 : vector<32x32xf32>
    %cst_55 = arith.constant 9.99999974E-6 : f32
    %171 = vector.broadcast %cst_55 : f32 to vector<1x32xf32>
    %172 = arith.addf %168, %171 : vector<1x32xf32>
    %173 = math.rsqrt %172 : vector<1x32xf32>
    %174 = vector.broadcast %173 : vector<1x32xf32> to vector<32x32xf32>
    %175 = arith.mulf %170, %174 : vector<32x32xf32>
    %176 = vector.extract_strided_slice %6 {offsets = [7, 0], sizes = [1, 32], strides = [1, 1]} : vector<16x32xf32> to vector<1x32xf32>
    %177 = vector.broadcast %176 : vector<1x32xf32> to vector<32x32xf32>
    %178 = arith.mulf %175, %177 : vector<32x32xf32>
    %179 = vector.extract_strided_slice %6 {offsets = [8, 0], sizes = [1, 32], strides = [1, 1]} : vector<16x32xf32> to vector<1x32xf32>
    %180 = vector.broadcast %179 : vector<1x32xf32> to vector<32x32xf32>
    %181 = arith.addf %178, %180 : vector<32x32xf32>
    %c0_56 = arith.constant 0 : index
    %c0_57 = arith.constant 0 : index
    %182 = vector.load %arg8[%c0_56, %c0_57] : memref<32x32xf32, #tpu.memory_space<vmem>>, vector<32x32xf32>
    tpu.vector_store %arg8[%c0_56, %c0_57], %181 {strides = array<i32>} : memref<32x32xf32, #tpu.memory_space<vmem>>, vector<32x32xf32>,
    return
  }
  func.func @transform_0(%arg0: i32) -> (i32, i32) {
    %c0_i32 = arith.constant 0 : i32
    %c0_i32_0 = arith.constant 0 : i32
    %c0_i32_1 = arith.constant 0 : i32
    return %c0_i32, %c0_i32_0 : i32, i32
  }
  func.func @transform_1(%arg0: i32) -> (i32, i32, i32) {
    %c0_i32 = arith.constant 0 : i32
    %c0_i32_0 = arith.constant 0 : i32
    %c0_i32_1 = arith.constant 0 : i32
    return %arg0, %c0_i32, %c0_i32_0 : i32, i32, i32
  }
  func.func @transform_2(%arg0: i32) -> (i32, i32, i32) {
    %c0_i32 = arith.constant 0 : i32
    %c0_i32_0 = arith.constant 0 : i32
    %c0_i32_1 = arith.constant 0 : i32
    return %arg0, %c0_i32, %c0_i32_0 : i32, i32, i32
  }
  func.func @transform_3(%arg0: i32) -> (i32, i32, i32) {
    %c0_i32 = arith.constant 0 : i32
    %c0_i32_0 = arith.constant 0 : i32
    %c0_i32_1 = arith.constant 0 : i32
    return %arg0, %c0_i32, %c0_i32_0 : i32, i32, i32
  }
  func.func @transform_4(%arg0: i32) -> (i32, i32, i32) {
    %c0_i32 = arith.constant 0 : i32
    %c0_i32_0 = arith.constant 0 : i32
    %c0_i32_1 = arith.constant 0 : i32
    return %arg0, %c0_i32, %c0_i32_0 : i32, i32, i32
  }
  func.func @transform_5(%arg0: i32) -> (i32, i32, i32) {
    %c0_i32 = arith.constant 0 : i32
    %c0_i32_0 = arith.constant 0 : i32
    %c0_i32_1 = arith.constant 0 : i32
    return %arg0, %c0_i32, %c0_i32_0 : i32, i32, i32
  }
  func.func @transform_6(%arg0: i32) -> (i32, i32, i32) {
    %c0_i32 = arith.constant 0 : i32
    %c0_i32_0 = arith.constant 0 : i32
    %c0_i32_1 = arith.constant 0 : i32
    return %arg0, %c0_i32, %c0_i32_0 : i32, i32, i32
  }
  func.func @transform_7(%arg0: i32) -> (i32, i32) {
    %c0_i32 = arith.constant 0 : i32
    %c0_i32_0 = arith.constant 0 : i32
    %c0_i32_1 = arith.constant 0 : i32
    return %c0_i32, %c0_i32_0 : i32, i32
  }
}

</mosaic_0001>

<llo_original>
// kernel: tpu_custom_call.1
$region0: #{tpu_custom_call.1}
  #allocation0 [shape = 'u32[]', space=smem, size = 0x4, offset = 0x4, fixed_abs, tag = 'smem constant byte address 0x4 - core index']
  #allocation1 [shape = 'u32[144,128]{1,0:T(1,128)}', space=vmem, size = 0x12000, scoped, tag = 'internal scratch']
  %s0 = inlined_call_operand.vmem [shape: f32[32,32], index: 0, kind: input, shape index: {}]
  %s1 = inlined_call_operand.vmem [shape: bf16[2,32,96], index: 1, kind: input, shape index: {}]
  %s2 = inlined_call_operand.vmem [shape: bf16[2,32,32], index: 2, kind: input, shape index: {}]
  %s3 = inlined_call_operand.hbm [shape: bf16[2,32,64], index: 3, kind: input, shape index: {}]
  %s4 = inlined_call_operand.vmem [shape: bf16[2,64,32], index: 4, kind: input, shape index: {}]
  %s5 = inlined_call_operand.hbm [shape: f32[2,16,32], index: 5, kind: input, shape index: {}]
  %s6 = inlined_call_operand.vmem [shape: f32[2,1,64], index: 6, kind: input, shape index: {}]
  %s7 = inlined_call_operand.hbm [shape: f32[32,32], index: 7, kind: output, shape index: {}]
  %s8 = sld [smem:[#allocation0]]
  $region73: #{tpu_custom_call.1} parent=0
    _
  %s10 = ssub.s32 1, %s8
  %s11 = scalar_select 0, %s10, %s8
  $region1: #{tpu_custom_call.1} parent=0
    #allocation2 [shape = 'u8[16384]{0}', space=vmem, size = 0x4000, scoped, tag = 'input window, operand 3']
    #allocation3 [shape = 's32[2]{0}', space=sflag, size = 0x8, scoped, tag = 'scoped memory for tpu_custom_call.1']
    #allocation4 [shape = 's32[2]{0}', space=sflag, size = 0x8, scoped, tag = 'scoped memory for tpu_custom_call.1']
    #allocation5 [shape = 'u8[16384]{0}', space=vmem, size = 0x4000, scoped, tag = 'input window, operand 5']
    #allocation6 [shape = 's32[2]{0}', space=sflag, size = 0x8, scoped, tag = 'scoped memory for tpu_custom_call.1']
    #allocation7 [shape = 'u8[16384]{0}', space=vmem, size = 0x4000, scoped, tag = 'output window, operand 0, single buffered']
    %12 = vsyncpa [#allocation3], 0
    %s13 = scalar_lea.sflag [#allocation3], 1
    %14 = vsyncpa %s13, 0
    %15 = vsyncpa [#allocation6], 0
    %s16 = scalar_lea.sflag [#allocation6], 1
    %17 = vsyncpa %s16, 0
    %18 = vsyncpa [#allocation4], 0
    loop: start=0, step=1, limit=4
    $region2: #{tpu_custom_call.1} parent=1 // loop_pre_header
      _
    $region3: #{tpu_custom_call.1} parent=1 // loop_header
      %s20 = sphi 0, %s24
      %p21 = scmp.ge.s32.totalorder %s20, 4
      %s28 = sphi 0, %s28
      %s30 = sphi 0, %s28
      %s31 = sphi 0, %s30
      %s45 = sphi 0, %s31
      %s51 = sphi 0, %s53
      %s54 = sphi 0, %s51
      %s55 = sphi 0, %s54
      %s71 = sphi 0, %s55
      %s77 = sphi 0, %s79
      %s80 = sphi 0, %s77
      %s81 = sphi 0, %s80
      %s97 = sphi 0, %s81
      %s103 = sphi 0, %s105
      %s106 = sphi 0, %s103
      %s107 = sphi 0, %s106
      %s123 = sphi 0, %s107
      %s129 = sphi 0, %s131
      %s132 = sphi 0, %s129
      %s133 = sphi 0, %s132
      %s149 = sphi 0, %s133
      %s155 = sphi 0, %s157
      %s158 = sphi 0, %s155
      %s159 = sphi 0, %s158
      %s175 = sphi 0, %s159
      %s181 = sphi 0, %s183
      %s184 = sphi 0, %s181
      %s185 = sphi 0, %s184
      %s201 = sphi 0, %s185
      %s205 = sphi 0, %s205
      %s207 = sphi 0, %s205
      %s208 = sphi 0, %s207
      %s222 = sphi 0, %s208
    $region4: #{tpu_custom_call.1} parent=1 // loop_header_branch
      %23 = sbr.rel (%p21) target = $region8
    $region5: #{tpu_custom_call.1} parent=1 // loop_body
      %s25 = ssub.s32 %s20, 1
      %s26 = ssub.s32 %s20, 2
      %s27 = sadd.s32 %s20, 1
      %s29 = sadd.s32 %s28, 1
      %p32 = scmp.eq.s32.totalorder %s20, 1
      %p33 = scmp.ne.s32.totalorder %s28, %s30
      %p34 = scmp.eq.s32.totalorder %s20, 0
      %p35 = por %p33, %p34
      %p36 = scmp.ne.s32.totalorder %s28, %s30
      %p37 = scmp.eq.s32.totalorder %s25, 1
      %p38 = por %p36, %p37
      %p39 = scmp.ne.s32.totalorder %s30, %s31
      %p40 = scmp.eq.s32.totalorder %s25, 0
      %p41 = por %p39, %p40
      %p42 = scmp.ne.s32.totalorder %s30, %s31
      %p43 = scmp.eq.s32.totalorder %s26, 1
      %p44 = por %p42, %p43
      %p46 = scmp.ne.s32.totalorder %s31, %s45
      %p47 = scmp.eq.s32.totalorder %s26, 0
      %p48 = por %p46, %p47
      %s49 = ssub.s32 %s20, %s27
      %p50 = scmp.eq.s32.totalorder %s49, 0
      %s52 = sadd.s32 %s51, 1
      %s53 = scalar_select %p50, %s51, %s52
      %p56 = pneg %p50
      %p57 = scmp.eq.s32.totalorder %s20, 1
      %p58 = por %p56, %p57
      %p59 = scmp.ne.s32.totalorder %s51, %s54
      %p60 = scmp.eq.s32.totalorder %s20, 0
      %p61 = por %p59, %p60
      %p62 = scmp.ne.s32.totalorder %s51, %s54
      %p63 = scmp.eq.s32.totalorder %s25, 1
      %p64 = por %p62, %p63
      %p65 = scmp.ne.s32.totalorder %s54, %s55
      %p66 = scmp.eq.s32.totalorder %s25, 0
      %p67 = por %p65, %p66
      %p68 = scmp.ne.s32.totalorder %s54, %s55
      %p69 = scmp.eq.s32.totalorder %s26, 1
      %p70 = por %p68, %p69
      %p72 = scmp.ne.s32.totalorder %s55, %s71
      %p73 = scmp.eq.s32.totalorder %s26, 0
      %p74 = por %p72, %p73
      %s75 = ssub.s32 %s20, %s27
      %p76 = scmp.eq.s32.totalorder %s75, 0
      %s78 = sadd.s32 %s77, 1
      %s79 = scalar_select %p76, %s77, %s78
      %p82 = pneg %p76
      %p83 = scmp.eq.s32.totalorder %s20, 1
      %p84 = por %p82, %p83
      %p85 = scmp.ne.s32.totalorder %s77, %s80
      %p86 = scmp.eq.s32.totalorder %s20, 0
      %p87 = por %p85, %p86
      %p88 = scmp.ne.s32.totalorder %s77, %s80
      %p89 = scmp.eq.s32.totalorder %s25, 1
      %p90 = por %p88, %p89
      %p91 = scmp.ne.s32.totalorder %s80, %s81
      %p92 = scmp.eq.s32.totalorder %s25, 0
      %p93 = por %p91, %p92
      %p94 = scmp.ne.s32.totalorder %s80, %s81
      %p95 = scmp.eq.s32.totalorder %s26, 1
      %p96 = por %p94, %p95
      %p98 = scmp.ne.s32.totalorder %s81, %s97
      %p99 = scmp.eq.s32.totalorder %s26, 0
      %p100 = por %p98, %p99
      %s101 = ssub.s32 %s20, %s27
      %p102 = scmp.eq.s32.totalorder %s101, 0
      %s104 = sadd.s32 %s103, 1
      %s105 = scalar_select %p102, %s103, %s104
      %p108 = pneg %p102
      %p109 = scmp.eq.s32.totalorder %s20, 1
      %p110 = por %p108, %p109
      %p111 = scmp.ne.s32.totalorder %s103, %s106
      %p112 = scmp.eq.s32.totalorder %s20, 0
      %p113 = por %p111, %p112
      %p114 = scmp.ne.s32.totalorder %s103, %s106
      %p115 = scmp.eq.s32.totalorder %s25, 1
      %p116 = por %p114, %p115
      %p117 = scmp.ne.s32.totalorder %s106, %s107
      %p118 = scmp.eq.s32.totalorder %s25, 0
      %p119 = por %p117, %p118
      %p120 = scmp.ne.s32.totalorder %s106, %s107
      %p121 = scmp.eq.s32.totalorder %s26, 1
      %p122 = por %p120, %p121
      %p124 = scmp.ne.s32.totalorder %s107, %s123
      %p125 = scmp.eq.s32.totalorder %s26, 0
      %p126 = por %p124, %p125
      %s127 = ssub.s32 %s20, %s27
      %p128 = scmp.eq.s32.totalorder %s127, 0
      %s130 = sadd.s32 %s129, 1
      %s131 = scalar_select %p128, %s129, %s130
      %p134 = pneg %p128
      %p135 = scmp.eq.s32.totalorder %s20, 1
      %p136 = por %p134, %p135
      %p137 = scmp.ne.s32.totalorder %s129, %s132
      %p138 = scmp.eq.s32.totalorder %s20, 0
      %p139 = por %p137, %p138
      %p140 = scmp.ne.s32.totalorder %s129, %s132
      %p141 = scmp.eq.s32.totalorder %s25, 1
      %p142 = por %p140, %p141
      %p143 = scmp.ne.s32.totalorder %s132, %s133
      %p144 = scmp.eq.s32.totalorder %s25, 0
      %p145 = por %p143, %p144
      %p146 = scmp.ne.s32.totalorder %s132, %s133
      %p147 = scmp.eq.s32.totalorder %s26, 1
      %p148 = por %p146, %p147
      %p150 = scmp.ne.s32.totalorder %s133, %s149
      %p151 = scmp.eq.s32.totalorder %s26, 0
      %p152 = por %p150, %p151
      %s153 = ssub.s32 %s20, %s27
      %p154 = scmp.eq.s32.totalorder %s153, 0
      %s156 = sadd.s32 %s155, 1
      %s157 = scalar_select %p154, %s155, %s156
      %p160 = pneg %p154
      %p161 = scmp.eq.s32.totalorder %s20, 1
      %p162 = por %p160, %p161
      %p163 = scmp.ne.s32.totalorder %s155, %s158
      %p164 = scmp.eq.s32.totalorder %s20, 0
      %p165 = por %p163, %p164
      %p166 = scmp.ne.s32.totalorder %s155, %s158
      %p167 = scmp.eq.s32.totalorder %s25, 1
      %p168 = por %p166, %p167
      %p169 = scmp.ne.s32.totalorder %s158, %s159
      %p170 = scmp.eq.s32.totalorder %s25, 0
      %p171 = por %p169, %p170
      %p172 = scmp.ne.s32.totalorder %s158, %s159
      %p173 = scmp.eq.s32.totalorder %s26, 1
      %p174 = por %p172, %p173
      %p176 = scmp.ne.s32.totalorder %s159, %s175
      %p177 = scmp.eq.s32.totalorder %s26, 0
      %p178 = por %p176, %p177
      %s179 = ssub.s32 %s20, %s27
      %p180 = scmp.eq.s32.totalorder %s179, 0
      %s182 = sadd.s32 %s181, 1
      %s183 = scalar_select %p180, %s181, %s182
      %p186 = pneg %p180
      %p187 = scmp.eq.s32.totalorder %s20, 1
      %p188 = por %p186, %p187
      %p189 = scmp.ne.s32.totalorder %s181, %s184
      %p190 = scmp.eq.s32.totalorder %s20, 0
      %p191 = por %p189, %p190
      %p192 = scmp.ne.s32.totalorder %s181, %s184
      %p193 = scmp.eq.s32.totalorder %s25, 1
      %p194 = por %p192, %p193
      %p195 = scmp.ne.s32.totalorder %s184, %s185
      %p196 = scmp.eq.s32.totalorder %s25, 0
      %p197 = por %p195, %p196
      %p198 = scmp.ne.s32.totalorder %s184, %s185
      %p199 = scmp.eq.s32.totalorder %s26, 1
      %p200 = por %p198, %p199
      %p202 = scmp.ne.s32.totalorder %s185, %s201
      %p203 = scmp.eq.s32.totalorder %s26, 0
      %p204 = por %p202, %p203
      %s206 = sadd.s32 %s205, 1
      %p209 = scmp.eq.s32.totalorder %s20, 1
      %p210 = scmp.ne.s32.totalorder %s205, %s207
      %p211 = scmp.eq.s32.totalorder %s20, 0
      %p212 = por %p210, %p211
      %p213 = scmp.ne.s32.totalorder %s205, %s207
      %p214 = scmp.eq.s32.totalorder %s25, 1
      %p215 = por %p213, %p214
      %p216 = scmp.ne.s32.totalorder %s207, %s208
      %p217 = scmp.eq.s32.totalorder %s25, 0
      %p218 = por %p216, %p217
      %p219 = scmp.ne.s32.totalorder %s207, %s208
      %p220 = scmp.eq.s32.totalorder %s26, 1
      %p221 = por %p219, %p220
      %p223 = scmp.ne.s32.totalorder %s208, %s222
      %p224 = scmp.eq.s32.totalorder %s26, 0
      %p225 = por %p223, %p224
      %p226 = scmp.le.s32.totalorder 1, %s20
      %p227 = scmp.lt.s32.totalorder %s20, 3
      %p228 = pnand %p226, %p227
      %p229 = pneg %p228
      // Predicated region
      $region9: #{tpu_custom_call.1} parent=5 // pred_check
        _
      $region10: #{tpu_custom_call.1} parent=5 // pred_check_branch
        %231 = sbr.rel (%p228) target = $region12
      $region11: #{tpu_custom_call.1} parent=5 // pred_region
        %s232 = ssub.s32 %s20, 1
        // Predicated region
        $region13: #{tpu_custom_call.1} parent=11 // pred_check
          %p233 = pneg %p41
        $region14: #{tpu_custom_call.1} parent=11 // pred_check_branch
          %235 = sbr.rel (%p233) target = $region16
        $region15: #{tpu_custom_call.1} parent=11 // pred_region
          _
        $region16: #{tpu_custom_call.1} parent=11 // pred_fallthru
          _
      $region12: #{tpu_custom_call.1} parent=5 // pred_fallthru
        _
      %p236 = scmp.lt.s32.totalorder %s20, 2
      // Predicated region
      $region17: #{tpu_custom_call.1} parent=5 // pred_check
        %p237 = pneg %p236
      $region18: #{tpu_custom_call.1} parent=5 // pred_check_branch
        %239 = sbr.rel (%p237) target = $region20
      $region19: #{tpu_custom_call.1} parent=5 // pred_region
        // Predicated region
        $region21: #{tpu_custom_call.1} parent=19 // pred_check
          %p240 = pneg %p61
        $region22: #{tpu_custom_call.1} parent=19 // pred_check_branch
          %242 = sbr.rel (%p240) target = $region24
        $region23: #{tpu_custom_call.1} parent=19 // pred_region
          %p243 = scmp.lt.s32.totalorder %s20, 1
          %s244 = scalar_select %p243, %s20, 1
          %s245 = smul.addr %s244, 4
          %s246 = smul.addr %s245, 4
          %s247 = scalar_lea.vmem %s1, %s246
        $region24: #{tpu_custom_call.1} parent=19 // pred_fallthru
          _
        // Predicated region
        $region25: #{tpu_custom_call.1} parent=19 // pred_check
          %p248 = pneg %p87
        $region26: #{tpu_custom_call.1} parent=19 // pred_check_branch
          %250 = sbr.rel (%p248) target = $region28
        $region27: #{tpu_custom_call.1} parent=19 // pred_region
          %p251 = scmp.lt.s32.totalorder %s20, 1
          %s252 = scalar_select %p251, %s20, 1
          %s253 = smul.addr %s252, 4
          %s254 = smul.addr %s253, 4
          %s255 = scalar_lea.vmem %s2, %s254
        $region28: #{tpu_custom_call.1} parent=19 // pred_fallthru
          _
        // Predicated region
        $region29: #{tpu_custom_call.1} parent=19 // pred_check
          %p256 = pneg %p113
        $region30: #{tpu_custom_call.1} parent=19 // pred_check_branch
          %258 = sbr.rel (%p256) target = $region32
        $region31: #{tpu_custom_call.1} parent=19 // pred_region
          %s259 = sand.u32 %s103, 1
          %s260 = scalar_lea.sflag [#allocation3], %s259
          %s261 = sand.u32 %s103, 1
          %s262 = smul.addr %s261, 16
          %s263 = scalar_lea.vmem [#allocation2], %s262
          %s265 = ssub.s32 256, 256
          %266 = vsyncadd %s260, %s265
          %s267 = smul.addr %s20, 4
          %s268 = smul.addr %s267, 64
          %s269 = scalar_lea.hbm %s3, %s268
          %s270 = sshll.u32 %s263, 4
          %s271 = int_to_ptr.vmem [resolvable:$true] %s270
          %276 = dma.hbm_to_vmem [thread:$0]  %s269, 256, %s271, %s260, 64, 64, 4
        $region32: #{tpu_custom_call.1} parent=19 // pred_fallthru
          _
        // Predicated region
        $region33: #{tpu_custom_call.1} parent=19 // pred_check
          %p277 = pneg %p139
        $region34: #{tpu_custom_call.1} parent=19 // pred_check_branch
          %279 = sbr.rel (%p277) target = $region36
        $region35: #{tpu_custom_call.1} parent=19 // pred_region
          %p280 = scmp.lt.s32.totalorder %s20, 1
          %s281 = scalar_select %p280, %s20, 1
          %s282 = smul.addr %s281, 8
          %s283 = smul.addr %s282, 4
          %s284 = scalar_lea.vmem %s4, %s283
        $region36: #{tpu_custom_call.1} parent=19 // pred_fallthru
          _
        // Predicated region
        $region37: #{tpu_custom_call.1} parent=19 // pred_check
          %p285 = pneg %p165
        $region38: #{tpu_custom_call.1} parent=19 // pred_check_branch
          %287 = sbr.rel (%p285) target = $region40
        $region39: #{tpu_custom_call.1} parent=19 // pred_region
          %s288 = sand.u32 %s155, 1
          %s289 = scalar_lea.sflag [#allocation6], %s288
          %s290 = sand.u32 %s155, 1
          %s291 = smul.addr %s290, 16
          %s292 = scalar_lea.vmem [#allocation5], %s291
          %s294 = ssub.s32 256, 256
          %295 = vsyncadd %s289, %s294
          %s296 = smul.addr %s20, 2
          %s297 = smul.addr %s296, 128
          %s298 = scalar_lea.hbm %s5, %s297
          %s299 = sshll.u32 %s292, 4
          %s300 = int_to_ptr.vmem [resolvable:$true] %s299
          %305 = dma.hbm_to_vmem [thread:$0]  %s298, 256, %s300, %s289, 128, 128, 8
        $region40: #{tpu_custom_call.1} parent=19 // pred_fallthru
          _
        // Predicated region
        $region41: #{tpu_custom_call.1} parent=19 // pred_check
          %p306 = pneg %p191
        $region42: #{tpu_custom_call.1} parent=19 // pred_check_branch
          %308 = sbr.rel (%p306) target = $region44
        $region43: #{tpu_custom_call.1} parent=19 // pred_region
          %p309 = scmp.lt.s32.totalorder %s20, 1
          %s310 = scalar_select %p309, %s20, 1
          %s311 = scalar_lea.vmem %s6, %s310
        $region44: #{tpu_custom_call.1} parent=19 // pred_fallthru
          _
      $region20: #{tpu_custom_call.1} parent=5 // pred_fallthru
        _
      %p312 = scmp.le.s32.totalorder 1, %s20
      %p313 = scmp.lt.s32.totalorder %s20, 3
      %p314 = pnand %p312, %p313
      %p315 = pneg %p314
      // Predicated region
      $region45: #{tpu_custom_call.1} parent=5 // pred_check
        _
      $region46: #{tpu_custom_call.1} parent=5 // pred_check_branch
        %317 = sbr.rel (%p314) target = $region48
      $region47: #{tpu_custom_call.1} parent=5 // pred_region
        %s318 = ssub.s32 %s20, 1
        %s319 = sand.u32 %s106, 1
        %s320 = scalar_lea.sflag [#allocation3], %s319
        %s321 = sand.u32 %s106, 1
        %s322 = smul.addr %s321, 16
        %s323 = scalar_lea.vmem [#allocation2], %s322
        // Predicated region
        $region49: #{tpu_custom_call.1} parent=47 // pred_check
          %p324 = pneg %p119
        $region50: #{tpu_custom_call.1} parent=47 // pred_check_branch
          %326 = sbr.rel (%p324) target = $region52
        $region51: #{tpu_custom_call.1} parent=47 // pred_region
          %327 = dma.done %s320, 256
        $region52: #{tpu_custom_call.1} parent=47 // pred_fallthru
          _
        %s328 = sand.u32 %s158, 1
        %s329 = scalar_lea.sflag [#allocation6], %s328
        %s330 = sand.u32 %s158, 1
        %s331 = smul.addr %s330, 16
        %s332 = scalar_lea.vmem [#allocation5], %s331
        // Predicated region
        $region53: #{tpu_custom_call.1} parent=47 // pred_check
          %p333 = pneg %p171
        $region54: #{tpu_custom_call.1} parent=47 // pred_check_branch
          %335 = sbr.rel (%p333) target = $region56
        $region55: #{tpu_custom_call.1} parent=47 // pred_region
          %336 = dma.done %s329, 256
        $region56: #{tpu_custom_call.1} parent=47 // pred_fallthru
          _
        %p337 = pneg %p41
        %p338 = pneg %p38
        %p339 = scmp.lt.s32.totalorder %s25, 1
        %s340 = scalar_select %p339, %s25, 1
        %s341 = smul.addr %s340, 4
        %s342 = smul.addr %s341, 4
        %s343 = scalar_lea.vmem %s1, %s342
        %p344 = pneg %p67
        %p345 = pneg %p64
        %p346 = scmp.lt.s32.totalorder %s25, 1
        %s347 = scalar_select %p346, %s25, 1
        %s348 = smul.addr %s347, 4
        %s349 = smul.addr %s348, 4
        %s350 = scalar_lea.vmem %s2, %s349
        %p351 = pneg %p93
        %p352 = pneg %p90
        %s353 = sand.u32 %s106, 1
        %s354 = scalar_lea.sflag [#allocation3], %s353
        %s355 = sand.u32 %s106, 1
        %s356 = smul.addr %s355, 16
        %s357 = scalar_lea.vmem [#allocation2], %s356
        %p358 = pneg %p119
        %p359 = pneg %p116
        %p360 = scmp.lt.s32.totalorder %s25, 1
        %s361 = scalar_select %p360, %s25, 1
        %s362 = smul.addr %s361, 8
        %s363 = smul.addr %s362, 4
        %s364 = scalar_lea.vmem %s4, %s363
        %p365 = pneg %p145
        %p366 = pneg %p142
        %s367 = sand.u32 %s158, 1
        %s368 = scalar_lea.sflag [#allocation6], %s367
        %s369 = sand.u32 %s158, 1
        %s370 = smul.addr %s369, 16
        %s371 = scalar_lea.vmem [#allocation5], %s370
        %p372 = pneg %p171
        %p373 = pneg %p168
        %p374 = scmp.lt.s32.totalorder %s25, 1
        %s375 = scalar_select %p374, %s25, 1
        %s376 = scalar_lea.vmem %s6, %s375
        %p377 = pneg %p197
        %p378 = pneg %p194
        %p379 = pneg %p218
        %p380 = pneg %p215
        %p381 = scmp.lt.s32.totalorder %s25, 1
        %s382 = scalar_select %p381, %s25, 1
        %s383 = smul.addr %s382, 4
        %s384 = smul.addr %s383, 4
        %s385 = scalar_lea.vmem %s1, %s384
        %p386 = scmp.lt.s32.totalorder %s25, 1
        %s387 = scalar_select %p386, %s25, 1
        %s388 = smul.addr %s387, 4
        %s389 = smul.addr %s388, 4
        %s390 = scalar_lea.vmem %s2, %s389
        %p391 = scmp.lt.s32.totalorder %s25, 1
        %s392 = scalar_select %p391, %s25, 1
        %s393 = smul.addr %s392, 8
        %s394 = smul.addr %s393, 4
        %s395 = scalar_lea.vmem %s4, %s394
        %p396 = scmp.lt.s32.totalorder %s25, 1
        %s397 = scalar_select %p396, %s25, 1
        %s398 = scalar_lea.vmem %s6, %s397
        %p400 = scmp.eq.s32.totalorder %s25, 0
        // Predicated region
        $region57: #{tpu_custom_call.1} parent=47 // pred_check
          %p401 = pneg %p400
        $region58: #{tpu_custom_call.1} parent=47 // pred_check_branch
          %403 = sbr.rel (%p401) target = $region60
        $region59: #{tpu_custom_call.1} parent=47 // pred_region
          %v404 = vld [vmem:[%s0] sm:$0xff]
          %v405 = vld [vmem:[%s0 + $0x8] sm:$0xff]
          %v406 = vld [vmem:[%s0 + $0x10] sm:$0xff]
          %v407 = vld [vmem:[%s0 + $0x18] sm:$0xff]
          %vm408 = vcmask 261120
          %409 = vst.msk [vmem:[#allocation7] sm:$0xff] %vm408, %v404
          %410 = vst.msk [vmem:[#allocation7 + $0x8] sm:$0xff] %vm408, %v405
          %411 = vst.msk [vmem:[#allocation7 + $0x10] sm:$0xff] %vm408, %v406
          %412 = vst.msk [vmem:[#allocation7 + $0x18] sm:$0xff] %vm408, %v407
        $region60: #{tpu_custom_call.1} parent=47 // pred_fallthru
          _
        %v413 = vld [vmem:[#allocation7] sm:$0xff]
        %v414 = vld [vmem:[#allocation7 + $0x8] sm:$0xff]
        %v415 = vld [vmem:[#allocation7 + $0x10] sm:$0xff]
        %v416 = vld [vmem:[#allocation7 + $0x18] sm:$0xff]
        %v417 = vpack.c.bf16 %v414, %v413
        %v418 = vpack.c.bf16 %v416, %v415
        %v419 = vld [vmem:[%s332] sm:$0xff]
        %v420 = vld [vmem:[%s332 + $0x8] sm:$0xff]
        %v421 = vld [vmem:[%s385] sm:$0xf]
        %v422 = vld [vmem:[%s385 + $0x4] sm:$0xf]
        %v423 = vld [vmem:[%s385 + $0x8] sm:$0xf]
        %v424 = vld [vmem:[%s385 + $0xc] sm:$0xf]
        %v429 = vunpack.c.l.b16 %v421
        %v430 = vunpack.c.l.b16 %v422
        %v431 = vunpack.c.l.b16 %v423
        %v432 = vunpack.c.l.b16 %v424
        %v433 = vpack.c.b16 %v430, %v429
        %v434 = vpack.c.b16 %v432, %v431
        %vm437 = vcmask 261120
        %v439 = vsel %vm437, %v417, 0
        %v442 = vsel %vm437, %v418, 0
        %444 = vmatprep.subr.bf16.mxu0 0
        %445 = vmatpush1.bf16.msra.mxu0 %v433
        %446 = vmatprep.subr.bf16.mxu0 0
        %447 = vmatpush1.bf16.msra.mxu0 %v434
        %448 = vmatprep.subr.bf16.mxu0 0
        %449 = vmatpush1.bf16.msra.mxu0 0
        %450 = vmatprep.subr.bf16.mxu0 0
        %451 = vmatpush1.bf16.msra.mxu0 0
        %452 = vmatprep.subr.bf16.mxu0 0
        %453 = vmatpush1.bf16.msra.mxu0 0
        %454 = vmatprep.subr.bf16.mxu0 0
        %455 = vmatpush1.bf16.msra.mxu0 0
        %456 = vmatprep.subr.bf16.mxu0 0
        %457 = vmatpush1.bf16.msra.mxu0 0
        %458 = vmatprep.subr.bf16.mxu0 0
        %459 = vmatpush1.bf16.msra.mxu0 0
        %460 = vmatprep.subr.bf16.mxu0 0
        %461 = vmatpush1.bf16.msra.mxu0 0
        %462 = vmatprep.subr.bf16.mxu0 0
        %463 = vmatpush1.bf16.msra.mxu0 0
        %464 = vmatprep.subr.bf16.mxu0 0
        %465 = vmatpush1.bf16.msra.mxu0 0
        %466 = vmatprep.subr.bf16.mxu0 0
        %467 = vmatpush1.bf16.msra.mxu0 0
        %468 = vmatprep.subr.bf16.mxu0 0
        %469 = vmatpush1.bf16.msra.mxu0 0
        %470 = vmatprep.subr.bf16.mxu0 0
        %471 = vmatpush1.bf16.msra.mxu0 0
        %472 = vmatprep.subr.bf16.mxu0 0
        %473 = vmatpush1.bf16.msra.mxu0 0
        %474 = vmatprep.subr.bf16.mxu0 0
        %475 = vmatpush1.bf16.msra.mxu0 0
        %476 = vmatprep.mubr.bf16.mxu0 0
        %477 = vmatmul.mubr.bf16.gmra.mrb[0].mxu0 %v439
        %v478 = vpop.f32.mrb[0].mxu0
        %v479 = vadd.f32 0.0, %v478
        %v480 = vpop.f32.mrb[0].mxu0
        %v481 = vpop.f32.mrb[0].mxu0
        %v482 = vadd.f32 0.0, %v481
        %v483 = vpop.f32.mrb[0].mxu0
        %484 = vmatprep.mubr.bf16.mxu0 0
        %485 = vmatmul.mubr.bf16.gmra.mrb[0].mxu0 %v442
        %v486 = vpop.f32.mrb[0].mxu0
        %v487 = vadd.f32 0.0, %v486
        %v488 = vpop.f32.mrb[0].mxu0
        %v489 = vpop.f32.mrb[0].mxu0
        %v490 = vadd.f32 0.0, %v489
        %v491 = vpop.f32.mrb[0].mxu0
        %492 = vdwg.mxu0
        %v493 = vlaneseq
        %v494 = vshrl.u32 %v493, 7
        %v495 = vsub.s32 0, %v494
        %v496 = vrot.slane %v419, %v495
        %v497 = vadd.f32 %v479, %v496
        %v498 = vadd.f32 %v482, %v496
        %v499 = vadd.f32 %v487, %v496
        %v500 = vadd.f32 %v490, %v496
        %v501 = vpack.c.bf16 %v498, %v497
        %v502 = vpack.c.bf16 %v500, %v499
        %v503 = vlaneseq
        %v504 = vshrl.u32 %v503, 7
        %v505 = vsub.s32 1, %v504
        %v506 = vrot.slane %v419, %v505
        %508 = vrot.lane.b32.xlu0 %v506, 32
        %v509 = vpop.permute.xlu0 %508
        %v511 = vadd.f32 %v479, %v509
        %v512 = vadd.f32 %v482, %v509
        %v513 = vadd.f32 %v487, %v509
        %v514 = vadd.f32 %v490, %v509
        %v515 = vpack.c.bf16 %v512, %v511
        %v516 = vpack.c.bf16 %v514, %v513
        %v517 = vlaneseq
        %v518 = vshrl.u32 %v517, 7
        %v519 = vsub.s32 2, %v518
        %v520 = vrot.slane %v419, %v519
        %522 = vrot.lane.b32.xlu0 %v520, 64
        %v523 = vpop.permute.xlu0 %522
        %v525 = vadd.f32 %v479, %v523
        %v526 = vadd.f32 %v482, %v523
        %v527 = vadd.f32 %v487, %v523
        %v528 = vadd.f32 %v490, %v523
        %v529 = vpack.c.bf16 %v526, %v525
        %v530 = vpack.c.bf16 %v528, %v527
        %532 = vrot.lane.b32.xlu0 %v515, 96
        %v533 = vpop.permute.xlu0 %532
        %vm534 = vcmask 64512
        %v536 = vsel %vm534, %v501, 0
        %v539 = vsel %vm534, %v533, 0
        %541 = vmatprep.subr.bf16.mxu0 0
        %542 = vmatpush1.bf16.xpose.msra.mxu0 %v539
        %543 = vmatprep.subr.bf16.mxu0 0
        %544 = vmatpush1.bf16.xpose.msra.mxu0 0
        %545 = vmatprep.subr.bf16.mxu0 0
        %546 = vmatpush1.bf16.xpose.msra.mxu0 0
        %547 = vmatprep.subr.bf16.mxu0 0
        %548 = vmatpush1.bf16.xpose.msra.mxu0 0
        %549 = vmatprep.subr.bf16.mxu0 0
        %550 = vmatpush1.bf16.xpose.msra.mxu0 0
        %551 = vmatprep.subr.bf16.mxu0 0
        %552 = vmatpush1.bf16.xpose.msra.mxu0 0
        %553 = vmatprep.subr.bf16.mxu0 0
        %554 = vmatpush1.bf16.xpose.msra.mxu0 0
        %555 = vmatprep.subr.bf16.mxu0 0
        %556 = vmatpush1.bf16.xpose.msra.mxu0 0
        %557 = vmatprep.subr.bf16.mxu0 0
        %558 = vmatpush1.bf16.xpose.msra.mxu0 0
        %559 = vmatprep.subr.bf16.mxu0 0
        %560 = vmatpush1.bf16.xpose.msra.mxu0 0
        %561 = vmatprep.subr.bf16.mxu0 0
        %562 = vmatpush1.bf16.xpose.msra.mxu0 0
        %563 = vmatprep.subr.bf16.mxu0 0
        %564 = vmatpush1.bf16.xpose.msra.mxu0 0
        %565 = vmatprep.subr.bf16.mxu0 0
        %566 = vmatpush1.bf16.xpose.msra.mxu0 0
        %567 = vmatprep.subr.bf16.mxu0 0
        %568 = vmatpush1.bf16.xpose.msra.mxu0 0
        %569 = vmatprep.subr.bf16.mxu0 0
        %570 = vmatpush1.bf16.xpose.msra.mxu0 0
        %571 = vmatprep.subr.bf16.mxu0 0
        %572 = vmatpush1.bf16.xpose.msra.mxu0 0
        %573 = vmatprep.mubr.bf16.mxu0 0
        %574 = vmatmul.mubr.bf16.gmra.mrb[0].mxu0 %v536
        %v575 = vpop.f32.mrb[0].mxu0
        %v576 = vadd.f32 0.0, %v575
        %v577 = vpop.f32.mrb[0].mxu0
        %v578 = vpop.f32.mrb[0].mxu0
        %v579 = vadd.f32 0.0, %v578
        %v580 = vpop.f32.mrb[0].mxu0
        %581 = vdwg.mxu0
        %583 = vrot.lane.b32.xlu0 %v516, 96
        %v584 = vpop.permute.xlu0 %583
        %v586 = vsel %vm534, %v502, 0
        %v589 = vsel %vm534, %v584, 0
        %591 = vmatprep.subr.bf16.mxu0 0
        %592 = vmatpush1.bf16.xpose.msra.mxu0 %v589
        %593 = vmatprep.subr.bf16.mxu0 0
        %594 = vmatpush1.bf16.xpose.msra.mxu0 0
        %595 = vmatprep.subr.bf16.mxu0 0
        %596 = vmatpush1.bf16.xpose.msra.mxu0 0
        %597 = vmatprep.subr.bf16.mxu0 0
        %598 = vmatpush1.bf16.xpose.msra.mxu0 0
        %599 = vmatprep.subr.bf16.mxu0 0
        %600 = vmatpush1.bf16.xpose.msra.mxu0 0
        %601 = vmatprep.subr.bf16.mxu0 0
        %602 = vmatpush1.bf16.xpose.msra.mxu0 0
        %603 = vmatprep.subr.bf16.mxu0 0
        %604 = vmatpush1.bf16.xpose.msra.mxu0 0
        %605 = vmatprep.subr.bf16.mxu0 0
        %606 = vmatpush1.bf16.xpose.msra.mxu0 0
        %607 = vmatprep.subr.bf16.mxu0 0
        %608 = vmatpush1.bf16.xpose.msra.mxu0 0
        %609 = vmatprep.subr.bf16.mxu0 0
        %610 = vmatpush1.bf16.xpose.msra.mxu0 0
        %611 = vmatprep.subr.bf16.mxu0 0
        %612 = vmatpush1.bf16.xpose.msra.mxu0 0
        %613 = vmatprep.subr.bf16.mxu0 0
        %614 = vmatpush1.bf16.xpose.msra.mxu0 0
        %615 = vmatprep.subr.bf16.mxu0 0
        %616 = vmatpush1.bf16.xpose.msra.mxu0 0
        %617 = vmatprep.subr.bf16.mxu0 0
        %618 = vmatpush1.bf16.xpose.msra.mxu0 0
        %619 = vmatprep.subr.bf16.mxu0 0
        %620 = vmatpush1.bf16.xpose.msra.mxu0 0
        %621 = vmatprep.subr.bf16.mxu0 0
        %622 = vmatpush1.bf16.xpose.msra.mxu0 0
        %623 = vmatprep.mubr.bf16.mxu0 0
        %624 = vmatmul.mubr.bf16.gmra.mrb[0].mxu0 %v586
        %v625 = vpop.f32.mrb[0].mxu0
        %v626 = vadd.f32 0.0, %v625
        %v627 = vpop.f32.mrb[0].mxu0
        %v628 = vpop.f32.mrb[0].mxu0
        %v629 = vadd.f32 0.0, %v628
        %v630 = vpop.f32.mrb[0].mxu0
        %631 = vdwg.mxu0
        %v632 = vmul.f32 %v576, 0.35355338
        %v633 = vmul.f32 %v579, 0.35355338
        %v634 = vmul.f32 %v626, 0.35355338
        %v635 = vmul.f32 %v629, 0.35355338
        %vm636 = vcmask 130048
        %v637 = vsel %vm636, %v632, -inf
        %638 = vmax.xlane.f32.xlu0 %v637
        %v639 = vpop.xlane.xlu0 %638
        %v640 = vsel %vm636, %v633, -inf
        %641 = vmax.xlane.f32.xlu0 %v640
        %v642 = vpop.xlane.xlu0 %641
        %v643 = vsel %vm636, %v634, -inf
        %644 = vmax.xlane.f32.xlu0 %v643
        %v645 = vpop.xlane.xlu0 %644
        %v646 = vsel %vm636, %v635, -inf
        %647 = vmax.xlane.f32.xlu0 %v646
        %v648 = vpop.xlane.xlu0 %647
        %v649 = vsub.f32 %v632, %v639
        %v650 = vsub.f32 %v633, %v642
        %v651 = vsub.f32 %v634, %v645
        %v652 = vsub.f32 %v635, %v648
        %v653 = vmul.f32 %v649, 1.442695
        %v654 = vpow.pop %v653
        %v655 = vmul.f32 %v650, 1.442695
        %v656 = vpow.pop %v655
        %v657 = vmul.f32 %v651, 1.442695
        %v658 = vpow.pop %v657
        %v659 = vmul.f32 %v652, 1.442695
        %v660 = vpow.pop %v659
        %v661 = vsel %vm636, %v654, 0.0
        %662 = vadd.xlane.f32.xlu0 %v661
        %v663 = vpop.xlane.xlu0 %662
        %v664 = vsel %vm636, %v656, 0.0
        %665 = vadd.xlane.f32.xlu0 %v664
        %v666 = vpop.xlane.xlu0 %665
        %v667 = vsel %vm636, %v658, 0.0
        %668 = vadd.xlane.f32.xlu0 %v667
        %v669 = vpop.xlane.xlu0 %668
        %v670 = vsel %vm636, %v660, 0.0
        %671 = vadd.xlane.f32.xlu0 %v670
        %v672 = vpop.xlane.xlu0 %671
        %v673 = vrcp.pop %v663
        %v674 = vrcp.pop %v666
        %v675 = vrcp.pop %v669
        %v676 = vrcp.pop %v672
        %v677 = vmul.f32 %v654, %v673
        %v678 = vmul.f32 %v656, %v674
        %v679 = vmul.f32 %v658, %v675
        %v680 = vmul.f32 %v660, %v676
        %v681 = vpack.c.bf16 %v678, %v677
        %v682 = vpack.c.bf16 %v680, %v679
        %684 = vrot.lane.b32.xlu0 %v529, 64
        %v685 = vpop.permute.xlu0 %684
        %v688 = vsel %vm636, %v681, 0
        %690 = vmatprep.subr.bf16.mxu0 0
        %691 = vmatpush1.bf16.msra.mxu0 %v685
        %692 = vmatprep.subr.bf16.mxu0 0
        %693 = vmatpush1.bf16.msra.mxu0 0
        %694 = vmatprep.subr.bf16.mxu0 0
        %695 = vmatpush1.bf16.msra.mxu0 0
        %696 = vmatprep.subr.bf16.mxu0 0
        %697 = vmatpush1.bf16.msra.mxu0 0
        %698 = vmatprep.subr.bf16.mxu0 0
        %699 = vmatpush1.bf16.msra.mxu0 0
        %700 = vmatprep.subr.bf16.mxu0 0
        %701 = vmatpush1.bf16.msra.mxu0 0
        %702 = vmatprep.subr.bf16.mxu0 0
        %703 = vmatpush1.bf16.msra.mxu0 0
        %704 = vmatprep.subr.bf16.mxu0 0
        %705 = vmatpush1.bf16.msra.mxu0 0
        %706 = vmatprep.subr.bf16.mxu0 0
        %707 = vmatpush1.bf16.msra.mxu0 0
        %708 = vmatprep.subr.bf16.mxu0 0
        %709 = vmatpush1.bf16.msra.mxu0 0
        %710 = vmatprep.subr.bf16.mxu0 0
        %711 = vmatpush1.bf16.msra.mxu0 0
        %712 = vmatprep.subr.bf16.mxu0 0
        %713 = vmatpush1.bf16.msra.mxu0 0
        %714 = vmatprep.subr.bf16.mxu0 0
        %715 = vmatpush1.bf16.msra.mxu0 0
        %716 = vmatprep.subr.bf16.mxu0 0
        %717 = vmatpush1.bf16.msra.mxu0 0
        %718 = vmatprep.subr.bf16.mxu0 0
        %719 = vmatpush1.bf16.msra.mxu0 0
        %720 = vmatprep.subr.bf16.mxu0 0
        %721 = vmatpush1.bf16.msra.mxu0 0
        %722 = vmatprep.mubr.bf16.mxu0 0
        %723 = vmatmul.mubr.bf16.gmra.mrb[0].mxu0 %v688
        %v724 = vpop.f32.mrb[0].mxu0
        %v725 = vadd.f32 0.0, %v724
        %v726 = vpop.f32.mrb[0].mxu0
        %v727 = vpop.f32.mrb[0].mxu0
        %v728 = vadd.f32 0.0, %v727
        %v729 = vpop.f32.mrb[0].mxu0
        %730 = vdwg.mxu0
        %732 = vrot.lane.b32.xlu0 %v530, 64
        %v733 = vpop.permute.xlu0 %732
        %v736 = vsel %vm636, %v682, 0
        %738 = vmatprep.subr.bf16.mxu0 0
        %739 = vmatpush1.bf16.msra.mxu0 %v733
        %740 = vmatprep.subr.bf16.mxu0 0
        %741 = vmatpush1.bf16.msra.mxu0 0
        %742 = vmatprep.subr.bf16.mxu0 0
        %743 = vmatpush1.bf16.msra.mxu0 0
        %744 = vmatprep.subr.bf16.mxu0 0
        %745 = vmatpush1.bf16.msra.mxu0 0
        %746 = vmatprep.subr.bf16.mxu0 0
        %747 = vmatpush1.bf16.msra.mxu0 0
        %748 = vmatprep.subr.bf16.mxu0 0
        %749 = vmatpush1.bf16.msra.mxu0 0
        %750 = vmatprep.subr.bf16.mxu0 0
        %751 = vmatpush1.bf16.msra.mxu0 0
        %752 = vmatprep.subr.bf16.mxu0 0
        %753 = vmatpush1.bf16.msra.mxu0 0
        %754 = vmatprep.subr.bf16.mxu0 0
        %755 = vmatpush1.bf16.msra.mxu0 0
        %756 = vmatprep.subr.bf16.mxu0 0
        %757 = vmatpush1.bf16.msra.mxu0 0
        %758 = vmatprep.subr.bf16.mxu0 0
        %759 = vmatpush1.bf16.msra.mxu0 0
        %760 = vmatprep.subr.bf16.mxu0 0
        %761 = vmatpush1.bf16.msra.mxu0 0
        %762 = vmatprep.subr.bf16.mxu0 0
        %763 = vmatpush1.bf16.msra.mxu0 0
        %764 = vmatprep.subr.bf16.mxu0 0
        %765 = vmatpush1.bf16.msra.mxu0 0
        %766 = vmatprep.subr.bf16.mxu0 0
        %767 = vmatpush1.bf16.msra.mxu0 0
        %768 = vmatprep.subr.bf16.mxu0 0
        %769 = vmatpush1.bf16.msra.mxu0 0
        %770 = vmatprep.mubr.bf16.mxu0 0
        %771 = vmatmul.mubr.bf16.gmra.mrb[0].mxu0 %v736
        %v772 = vpop.f32.mrb[0].mxu0
        %v773 = vadd.f32 0.0, %v772
        %v774 = vpop.f32.mrb[0].mxu0
        %v775 = vpop.f32.mrb[0].mxu0
        %v776 = vadd.f32 0.0, %v775
        %v777 = vpop.f32.mrb[0].mxu0
        %778 = vdwg.mxu0
        %780 = vrot.lane.b32.xlu0 %v501, 120
        %v781 = vpop.permute.xlu0 %780
        %782 = vrot.lane.b32.xlu0 %v515, 88
        %v783 = vpop.permute.xlu0 %782
        %v785 = vsel %vm534, %v781, 0
        %v788 = vsel %vm534, %v783, 0
        %790 = vmatprep.subr.bf16.mxu0 0
        %791 = vmatpush1.bf16.xpose.msra.mxu0 %v788
        %792 = vmatprep.subr.bf16.mxu0 0
        %793 = vmatpush1.bf16.xpose.msra.mxu0 0
        %794 = vmatprep.subr.bf16.mxu0 0
        %795 = vmatpush1.bf16.xpose.msra.mxu0 0
        %796 = vmatprep.subr.bf16.mxu0 0
        %797 = vmatpush1.bf16.xpose.msra.mxu0 0
        %798 = vmatprep.subr.bf16.mxu0 0
        %799 = vmatpush1.bf16.xpose.msra.mxu0 0
        %800 = vmatprep.subr.bf16.mxu0 0
        %801 = vmatpush1.bf16.xpose.msra.mxu0 0
        %802 = vmatprep.subr.bf16.mxu0 0
        %803 = vmatpush1.bf16.xpose.msra.mxu0 0
        %804 = vmatprep.subr.bf16.mxu0 0
        %805 = vmatpush1.bf16.xpose.msra.mxu0 0
        %806 = vmatprep.subr.bf16.mxu0 0
        %807 = vmatpush1.bf16.xpose.msra.mxu0 0
        %808 = vmatprep.subr.bf16.mxu0 0
        %809 = vmatpush1.bf16.xpose.msra.mxu0 0
        %810 = vmatprep.subr.bf16.mxu0 0
        %811 = vmatpush1.bf16.xpose.msra.mxu0 0
        %812 = vmatprep.subr.bf16.mxu0 0
        %813 = vmatpush1.bf16.xpose.msra.mxu0 0
        %814 = vmatprep.subr.bf16.mxu0 0
        %815 = vmatpush1.bf16.xpose.msra.mxu0 0
        %816 = vmatprep.subr.bf16.mxu0 0
        %817 = vmatpush1.bf16.xpose.msra.mxu0 0
        %818 = vmatprep.subr.bf16.mxu0 0
        %819 = vmatpush1.bf16.xpose.msra.mxu0 0
        %820 = vmatprep.subr.bf16.mxu0 0
        %821 = vmatpush1.bf16.xpose.msra.mxu0 0
        %822 = vmatprep.mubr.bf16.mxu0 0
        %823 = vmatmul.mubr.bf16.gmra.mrb[0].mxu0 %v785
        %v824 = vpop.f32.mrb[0].mxu0
        %v825 = vadd.f32 0.0, %v824
        %v826 = vpop.f32.mrb[0].mxu0
        %v827 = vpop.f32.mrb[0].mxu0
        %v828 = vadd.f32 0.0, %v827
        %v829 = vpop.f32.mrb[0].mxu0
        %830 = vdwg.mxu0
        %832 = vrot.lane.b32.xlu0 %v502, 120
        %v833 = vpop.permute.xlu0 %832
        %834 = vrot.lane.b32.xlu0 %v516, 88
        %v835 = vpop.permute.xlu0 %834
        %v837 = vsel %vm534, %v833, 0
        %v840 = vsel %vm534, %v835, 0
        %842 = vmatprep.subr.bf16.mxu0 0
        %843 = vmatpush1.bf16.xpose.msra.mxu0 %v840
        %844 = vmatprep.subr.bf16.mxu0 0
        %845 = vmatpush1.bf16.xpose.msra.mxu0 0
        %846 = vmatprep.subr.bf16.mxu0 0
        %847 = vmatpush1.bf16.xpose.msra.mxu0 0
        %848 = vmatprep.subr.bf16.mxu0 0
        %849 = vmatpush1.bf16.xpose.msra.mxu0 0
        %850 = vmatprep.subr.bf16.mxu0 0
        %851 = vmatpush1.bf16.xpose.msra.mxu0 0
        %852 = vmatprep.subr.bf16.mxu0 0
        %853 = vmatpush1.bf16.xpose.msra.mxu0 0
        %854 = vmatprep.subr.bf16.mxu0 0
        %855 = vmatpush1.bf16.xpose.msra.mxu0 0
        %856 = vmatprep.subr.bf16.mxu0 0
        %857 = vmatpush1.bf16.xpose.msra.mxu0 0
        %858 = vmatprep.subr.bf16.mxu0 0
        %859 = vmatpush1.bf16.xpose.msra.mxu0 0
        %860 = vmatprep.subr.bf16.mxu0 0
        %861 = vmatpush1.bf16.xpose.msra.mxu0 0
        %862 = vmatprep.subr.bf16.mxu0 0
        %863 = vmatpush1.bf16.xpose.msra.mxu0 0
        %864 = vmatprep.subr.bf16.mxu0 0
        %865 = vmatpush1.bf16.xpose.msra.mxu0 0
        %866 = vmatprep.subr.bf16.mxu0 0
        %867 = vmatpush1.bf16.xpose.msra.mxu0 0
        %868 = vmatprep.subr.bf16.mxu0 0
        %869 = vmatpush1.bf16.xpose.msra.mxu0 0
        %870 = vmatprep.subr.bf16.mxu0 0
        %871 = vmatpush1.bf16.xpose.msra.mxu0 0
        %872 = vmatprep.subr.bf16.mxu0 0
        %873 = vmatpush1.bf16.xpose.msra.mxu0 0
        %874 = vmatprep.mubr.bf16.mxu0 0
        %875 = vmatmul.mubr.bf16.gmra.mrb[0].mxu0 %v837
        %v876 = vpop.f32.mrb[0].mxu0
        %v877 = vadd.f32 0.0, %v876
        %v878 = vpop.f32.mrb[0].mxu0
        %v879 = vpop.f32.mrb[0].mxu0
        %v880 = vadd.f32 0.0, %v879
        %v881 = vpop.f32.mrb[0].mxu0
        %882 = vdwg.mxu0
        %v883 = vmul.f32 %v825, 0.35355338
        %v884 = vmul.f32 %v828, 0.35355338
        %v885 = vmul.f32 %v877, 0.35355338
        %v886 = vmul.f32 %v880, 0.35355338
        %v887 = vsel %vm636, %v883, -inf
        %888 = vmax.xlane.f32.xlu0 %v887
        %v889 = vpop.xlane.xlu0 %888
        %v890 = vsel %vm636, %v884, -inf
        %891 = vmax.xlane.f32.xlu0 %v890
        %v892 = vpop.xlane.xlu0 %891
        %v893 = vsel %vm636, %v885, -inf
        %894 = vmax.xlane.f32.xlu0 %v893
        %v895 = vpop.xlane.xlu0 %894
        %v896 = vsel %vm636, %v886, -inf
        %897 = vmax.xlane.f32.xlu0 %v896
        %v898 = vpop.xlane.xlu0 %897
        %v899 = vsub.f32 %v883, %v889
        %v900 = vsub.f32 %v884, %v892
        %v901 = vsub.f32 %v885, %v895
        %v902 = vsub.f32 %v886, %v898
        %v903 = vmul.f32 %v899, 1.442695
        %v904 = vpow.pop %v903
        %v905 = vmul.f32 %v900, 1.442695
        %v906 = vpow.pop %v905
        %v907 = vmul.f32 %v901, 1.442695
        %v908 = vpow.pop %v907
        %v909 = vmul.f32 %v902, 1.442695
        %v910 = vpow.pop %v909
        %v911 = vsel %vm636, %v904, 0.0
        %912 = vadd.xlane.f32.xlu0 %v911
        %v913 = vpop.xlane.xlu0 %912
        %v914 = vsel %vm636, %v906, 0.0
        %915 = vadd.xlane.f32.xlu0 %v914
        %v916 = vpop.xlane.xlu0 %915
        %v917 = vsel %vm636, %v908, 0.0
        %918 = vadd.xlane.f32.xlu0 %v917
        %v919 = vpop.xlane.xlu0 %918
        %v920 = vsel %vm636, %v910, 0.0
        %921 = vadd.xlane.f32.xlu0 %v920
        %v922 = vpop.xlane.xlu0 %921
        %v923 = vrcp.pop %v913
        %v924 = vrcp.pop %v916
        %v925 = vrcp.pop %v919
        %v926 = vrcp.pop %v922
        %v927 = vmul.f32 %v904, %v923
        %v928 = vmul.f32 %v906, %v924
        %v929 = vmul.f32 %v908, %v925
        %v930 = vmul.f32 %v910, %v926
        %v931 = vpack.c.bf16 %v928, %v927
        %v932 = vpack.c.bf16 %v930, %v929
        %933 = vrot.lane.b32.xlu0 %v529, 56
        %v934 = vpop.permute.xlu0 %933
        %v937 = vsel %vm636, %v931, 0
        %939 = vmatprep.subr.bf16.mxu0 0
        %940 = vmatpush1.bf16.msra.mxu0 %v934
        %941 = vmatprep.subr.bf16.mxu0 0
        %942 = vmatpush1.bf16.msra.mxu0 0
        %943 = vmatprep.subr.bf16.mxu0 0
        %944 = vmatpush1.bf16.msra.mxu0 0
        %945 = vmatprep.subr.bf16.mxu0 0
        %946 = vmatpush1.bf16.msra.mxu0 0
        %947 = vmatprep.subr.bf16.mxu0 0
        %948 = vmatpush1.bf16.msra.mxu0 0
        %949 = vmatprep.subr.bf16.mxu0 0
        %950 = vmatpush1.bf16.msra.mxu0 0
        %951 = vmatprep.subr.bf16.mxu0 0
        %952 = vmatpush1.bf16.msra.mxu0 0
        %953 = vmatprep.subr.bf16.mxu0 0
        %954 = vmatpush1.bf16.msra.mxu0 0
        %955 = vmatprep.subr.bf16.mxu0 0
        %956 = vmatpush1.bf16.msra.mxu0 0
        %957 = vmatprep.subr.bf16.mxu0 0
        %958 = vmatpush1.bf16.msra.mxu0 0
        %959 = vmatprep.subr.bf16.mxu0 0
        %960 = vmatpush1.bf16.msra.mxu0 0
        %961 = vmatprep.subr.bf16.mxu0 0
        %962 = vmatpush1.bf16.msra.mxu0 0
        %963 = vmatprep.subr.bf16.mxu0 0
        %964 = vmatpush1.bf16.msra.mxu0 0
        %965 = vmatprep.subr.bf16.mxu0 0
        %966 = vmatpush1.bf16.msra.mxu0 0
        %967 = vmatprep.subr.bf16.mxu0 0
        %968 = vmatpush1.bf16.msra.mxu0 0
        %969 = vmatprep.subr.bf16.mxu0 0
        %970 = vmatpush1.bf16.msra.mxu0 0
        %971 = vmatprep.mubr.bf16.mxu0 0
        %972 = vmatmul.mubr.bf16.gmra.mrb[0].mxu0 %v937
        %v973 = vpop.f32.mrb[0].mxu0
        %v974 = vadd.f32 0.0, %v973
        %v975 = vpop.f32.mrb[0].mxu0
        %v976 = vpop.f32.mrb[0].mxu0
        %v977 = vadd.f32 0.0, %v976
        %v978 = vpop.f32.mrb[0].mxu0
        %979 = vdwg.mxu0
        %980 = vrot.lane.b32.xlu0 %v530, 56
        %v981 = vpop.permute.xlu0 %980
        %v984 = vsel %vm636, %v932, 0
        %986 = vmatprep.subr.bf16.mxu0 0
        %987 = vmatpush1.bf16.msra.mxu0 %v981
        %988 = vmatprep.subr.bf16.mxu0 0
        %989 = vmatpush1.bf16.msra.mxu0 0
        %990 = vmatprep.subr.bf16.mxu0 0
        %991 = vmatpush1.bf16.msra.mxu0 0
        %992 = vmatprep.subr.bf16.mxu0 0
        %993 = vmatpush1.bf16.msra.mxu0 0
        %994 = vmatprep.subr.bf16.mxu0 0
        %995 = vmatpush1.bf16.msra.mxu0 0
        %996 = vmatprep.subr.bf16.mxu0 0
        %997 = vmatpush1.bf16.msra.mxu0 0
        %998 = vmatprep.subr.bf16.mxu0 0
        %999 = vmatpush1.bf16.msra.mxu0 0
        %1000 = vmatprep.subr.bf16.mxu0 0
        %1001 = vmatpush1.bf16.msra.mxu0 0
        %1002 = vmatprep.subr.bf16.mxu0 0
        %1003 = vmatpush1.bf16.msra.mxu0 0
        %1004 = vmatprep.subr.bf16.mxu0 0
        %1005 = vmatpush1.bf16.msra.mxu0 0
        %1006 = vmatprep.subr.bf16.mxu0 0
        %1007 = vmatpush1.bf16.msra.mxu0 0
        %1008 = vmatprep.subr.bf16.mxu0 0
        %1009 = vmatpush1.bf16.msra.mxu0 0
        %1010 = vmatprep.subr.bf16.mxu0 0
        %1011 = vmatpush1.bf16.msra.mxu0 0
        %1012 = vmatprep.subr.bf16.mxu0 0
        %1013 = vmatpush1.bf16.msra.mxu0 0
        %1014 = vmatprep.subr.bf16.mxu0 0
        %1015 = vmatpush1.bf16.msra.mxu0 0
        %1016 = vmatprep.subr.bf16.mxu0 0
        %1017 = vmatpush1.bf16.msra.mxu0 0
        %1018 = vmatprep.mubr.bf16.mxu0 0
        %1019 = vmatmul.mubr.bf16.gmra.mrb[0].mxu0 %v984
        %v1020 = vpop.f32.mrb[0].mxu0
        %v1021 = vadd.f32 0.0, %v1020
        %v1022 = vpop.f32.mrb[0].mxu0
        %v1023 = vpop.f32.mrb[0].mxu0
        %v1024 = vadd.f32 0.0, %v1023
        %v1025 = vpop.f32.mrb[0].mxu0
        %1026 = vdwg.mxu0
        %1027 = vrot.lane.b32.xlu0 %v501, 112
        %v1028 = vpop.permute.xlu0 %1027
        %1029 = vrot.lane.b32.xlu0 %v515, 80
        %v1030 = vpop.permute.xlu0 %1029
        %v1032 = vsel %vm534, %v1028, 0
        %v1035 = vsel %vm534, %v1030, 0
        %1037 = vmatprep.subr.bf16.mxu0 0
        %1038 = vmatpush1.bf16.xpose.msra.mxu0 %v1035
        %1039 = vmatprep.subr.bf16.mxu0 0
        %1040 = vmatpush1.bf16.xpose.msra.mxu0 0
        %1041 = vmatprep.subr.bf16.mxu0 0
        %1042 = vmatpush1.bf16.xpose.msra.mxu0 0
        %1043 = vmatprep.subr.bf16.mxu0 0
        %1044 = vmatpush1.bf16.xpose.msra.mxu0 0
        %1045 = vmatprep.subr.bf16.mxu0 0
        %1046 = vmatpush1.bf16.xpose.msra.mxu0 0
        %1047 = vmatprep.subr.bf16.mxu0 0
        %1048 = vmatpush1.bf16.xpose.msra.mxu0 0
        %1049 = vmatprep.subr.bf16.mxu0 0
        %1050 = vmatpush1.bf16.xpose.msra.mxu0 0
        %1051 = vmatprep.subr.bf16.mxu0 0
        %1052 = vmatpush1.bf16.xpose.msra.mxu0 0
        %1053 = vmatprep.subr.bf16.mxu0 0
        %1054 = vmatpush1.bf16.xpose.msra.mxu0 0
        %1055 = vmatprep.subr.bf16.mxu0 0
        %1056 = vmatpush1.bf16.xpose.msra.mxu0 0
        %1057 = vmatprep.subr.bf16.mxu0 0
        %1058 = vmatpush1.bf16.xpose.msra.mxu0 0
        %1059 = vmatprep.subr.bf16.mxu0 0
        %1060 = vmatpush1.bf16.xpose.msra.mxu0 0
        %1061 = vmatprep.subr.bf16.mxu0 0
        %1062 = vmatpush1.bf16.xpose.msra.mxu0 0
        %1063 = vmatprep.subr.bf16.mxu0 0
        %1064 = vmatpush1.bf16.xpose.msra.mxu0 0
        %1065 = vmatprep.subr.bf16.mxu0 0
        %1066 = vmatpush1.bf16.xpose.msra.mxu0 0
        %1067 = vmatprep.subr.bf16.mxu0 0
        %1068 = vmatpush1.bf16.xpose.msra.mxu0 0
        %1069 = vmatprep.mubr.bf16.mxu0 0
        %1070 = vmatmul.mubr.bf16.gmra.mrb[0].mxu0 %v1032
        %v1071 = vpop.f32.mrb[0].mxu0
        %v1072 = vadd.f32 0.0, %v1071
        %v1073 = vpop.f32.mrb[0].mxu0
        %v1074 = vpop.f32.mrb[0].mxu0
        %v1075 = vadd.f32 0.0, %v1074
        %v1076 = vpop.f32.mrb[0].mxu0
        %1077 = vdwg.mxu0
        %1078 = vrot.lane.b32.xlu0 %v502, 112
        %v1079 = vpop.permute.xlu0 %1078
        %1080 = vrot.lane.b32.xlu0 %v516, 80
        %v1081 = vpop.permute.xlu0 %1080
        %v1083 = vsel %vm534, %v1079, 0
        %v1086 = vsel %vm534, %v1081, 0
        %1088 = vmatprep.subr.bf16.mxu0 0
        %1089 = vmatpush1.bf16.xpose.msra.mxu0 %v1086
        %1090 = vmatprep.subr.bf16.mxu0 0
        %1091 = vmatpush1.bf16.xpose.msra.mxu0 0
        %1092 = vmatprep.subr.bf16.mxu0 0
        %1093 = vmatpush1.bf16.xpose.msra.mxu0 0
        %1094 = vmatprep.subr.bf16.mxu0 0
        %1095 = vmatpush1.bf16.xpose.msra.mxu0 0
        %1096 = vmatprep.subr.bf16.mxu0 0
        %1097 = vmatpush1.bf16.xpose.msra.mxu0 0
        %1098 = vmatprep.subr.bf16.mxu0 0
        %1099 = vmatpush1.bf16.xpose.msra.mxu0 0
        %1100 = vmatprep.subr.bf16.mxu0 0
        %1101 = vmatpush1.bf16.xpose.msra.mxu0 0
        %1102 = vmatprep.subr.bf16.mxu0 0
        %1103 = vmatpush1.bf16.xpose.msra.mxu0 0
        %1104 = vmatprep.subr.bf16.mxu0 0
        %1105 = vmatpush1.bf16.xpose.msra.mxu0 0
        %1106 = vmatprep.subr.bf16.mxu0 0
        %1107 = vmatpush1.bf16.xpose.msra.mxu0 0
        %1108 = vmatprep.subr.bf16.mxu0 0
        %1109 = vmatpush1.bf16.xpose.msra.mxu0 0
        %1110 = vmatprep.subr.bf16.mxu0 0
        %1111 = vmatpush1.bf16.xpose.msra.mxu0 0
        %1112 = vmatprep.subr.bf16.mxu0 0
        %1113 = vmatpush1.bf16.xpose.msra.mxu0 0
        %1114 = vmatprep.subr.bf16.mxu0 0
        %1115 = vmatpush1.bf16.xpose.msra.mxu0 0
        %1116 = vmatprep.subr.bf16.mxu0 0
        %1117 = vmatpush1.bf16.xpose.msra.mxu0 0
        %1118 = vmatprep.subr.bf16.mxu0 0
        %1119 = vmatpush1.bf16.xpose.msra.mxu0 0
        %1120 = vmatprep.mubr.bf16.mxu0 0
        %1121 = vmatmul.mubr.bf16.gmra.mrb[0].mxu0 %v1083
        %v1122 = vpop.f32.mrb[0].mxu0
        %v1123 = vadd.f32 0.0, %v1122
        %v1124 = vpop.f32.mrb[0].mxu0
        %v1125 = vpop.f32.mrb[0].mxu0
        %v1126 = vadd.f32 0.0, %v1125
        %v1127 = vpop.f32.mrb[0].mxu0
        %1128 = vdwg.mxu0
        %v1129 = vmul.f32 %v1072, 0.35355338
        %v1130 = vmul.f32 %v1075, 0.35355338
        %v1131 = vmul.f32 %v1123, 0.35355338
        %v1132 = vmul.f32 %v1126, 0.35355338
        %v1133 = vsel %vm636, %v1129, -inf
        %1134 = vmax.xlane.f32.xlu0 %v1133
        %v1135 = vpop.xlane.xlu0 %1134
        %v1136 = vsel %vm636, %v1130, -inf
        %1137 = vmax.xlane.f32.xlu0 %v1136
        %v1138 = vpop.xlane.xlu0 %1137
        %v1139 = vsel %vm636, %v1131, -inf
        %1140 = vmax.xlane.f32.xlu0 %v1139
        %v1141 = vpop.xlane.xlu0 %1140
        %v1142 = vsel %vm636, %v1132, -inf
        %1143 = vmax.xlane.f32.xlu0 %v1142
        %v1144 = vpop.xlane.xlu0 %1143
        %v1145 = vsub.f32 %v1129, %v1135
        %v1146 = vsub.f32 %v1130, %v1138
        %v1147 = vsub.f32 %v1131, %v1141
        %v1148 = vsub.f32 %v1132, %v1144
        %v1149 = vmul.f32 %v1145, 1.442695
        %v1150 = vpow.pop %v1149
        %v1151 = vmul.f32 %v1146, 1.442695
        %v1152 = vpow.pop %v1151
        %v1153 = vmul.f32 %v1147, 1.442695
        %v1154 = vpow.pop %v1153
        %v1155 = vmul.f32 %v1148, 1.442695
        %v1156 = vpow.pop %v1155
        %v1157 = vsel %vm636, %v1150, 0.0
        %1158 = vadd.xlane.f32.xlu0 %v1157
        %v1159 = vpop.xlane.xlu0 %1158
        %v1160 = vsel %vm636, %v1152, 0.0
        %1161 = vadd.xlane.f32.xlu0 %v1160
        %v1162 = vpop.xlane.xlu0 %1161
        %v1163 = vsel %vm636, %v1154, 0.0
        %1164 = vadd.xlane.f32.xlu0 %v1163
        %v1165 = vpop.xlane.xlu0 %1164
        %v1166 = vsel %vm636, %v1156, 0.0
        %1167 = vadd.xlane.f32.xlu0 %v1166
        %v1168 = vpop.xlane.xlu0 %1167
        %v1169 = vrcp.pop %v1159
        %v1170 = vrcp.pop %v1162
        %v1171 = vrcp.pop %v1165
        %v1172 = vrcp.pop %v1168
        %v1173 = vmul.f32 %v1150, %v1169
        %v1174 = vmul.f32 %v1152, %v1170
        %v1175 = vmul.f32 %v1154, %v1171
        %v1176 = vmul.f32 %v1156, %v1172
        %v1177 = vpack.c.bf16 %v1174, %v1173
        %v1178 = vpack.c.bf16 %v1176, %v1175
        %1179 = vrot.lane.b32.xlu0 %v529, 48
        %v1180 = vpop.permute.xlu0 %1179
        %v1183 = vsel %vm636, %v1177, 0
        %1185 = vmatprep.subr.bf16.mxu0 0
        %1186 = vmatpush1.bf16.msra.mxu0 %v1180
        %1187 = vmatprep.subr.bf16.mxu0 0
        %1188 = vmatpush1.bf16.msra.mxu0 0
        %1189 = vmatprep.subr.bf16.mxu0 0
        %1190 = vmatpush1.bf16.msra.mxu0 0
        %1191 = vmatprep.subr.bf16.mxu0 0
        %1192 = vmatpush1.bf16.msra.mxu0 0
        %1193 = vmatprep.subr.bf16.mxu0 0
        %1194 = vmatpush1.bf16.msra.mxu0 0
        %1195 = vmatprep.subr.bf16.mxu0 0
        %1196 = vmatpush1.bf16.msra.mxu0 0
        %1197 = vmatprep.subr.bf16.mxu0 0
        %1198 = vmatpush1.bf16.msra.mxu0 0
        %1199 = vmatprep.subr.bf16.mxu0 0
        %1200 = vmatpush1.bf16.msra.mxu0 0
        %1201 = vmatprep.subr.bf16.mxu0 0
        %1202 = vmatpush1.bf16.msra.mxu0 0
        %1203 = vmatprep.subr.bf16.mxu0 0
        %1204 = vmatpush1.bf16.msra.mxu0 0
        %1205 = vmatprep.subr.bf16.mxu0 0
        %1206 = vmatpush1.bf16.msra.mxu0 0
        %1207 = vmatprep.subr.bf16.mxu0 0
        %1208 = vmatpush1.bf16.msra.mxu0 0
        %1209 = vmatprep.subr.bf16.mxu0 0
        %1210 = vmatpush1.bf16.msra.mxu0 0
        %1211 = vmatprep.subr.bf16.mxu0 0
        %1212 = vmatpush1.bf16.msra.mxu0 0
        %1213 = vmatprep.subr.bf16.mxu0 0
        %1214 = vmatpush1.bf16.msra.mxu0 0
        %1215 = vmatprep.subr.bf16.mxu0 0
        %1216 = vmatpush1.bf16.msra.mxu0 0
        %1217 = vmatprep.mubr.bf16.mxu0 0
        %1218 = vmatmul.mubr.bf16.gmra.mrb[0].mxu0 %v1183
        %v1219 = vpop.f32.mrb[0].mxu0
        %v1220 = vadd.f32 0.0, %v1219
        %v1221 = vpop.f32.mrb[0].mxu0
        %v1222 = vpop.f32.mrb[0].mxu0
        %v1223 = vadd.f32 0.0, %v1222
        %v1224 = vpop.f32.mrb[0].mxu0
        %1225 = vdwg.mxu0
        %1226 = vrot.lane.b32.xlu0 %v530, 48
        %v1227 = vpop.permute.xlu0 %1226
        %v1230 = vsel %vm636, %v1178, 0
        %1232 = vmatprep.subr.bf16.mxu0 0
        %1233 = vmatpush1.bf16.msra.mxu0 %v1227
        %1234 = vmatprep.subr.bf16.mxu0 0
        %1235 = vmatpush1.bf16.msra.mxu0 0
        %1236 = vmatprep.subr.bf16.mxu0 0
        %1237 = vmatpush1.bf16.msra.mxu0 0
        %1238 = vmatprep.subr.bf16.mxu0 0
        %1239 = vmatpush1.bf16.msra.mxu0 0
        %1240 = vmatprep.subr.bf16.mxu0 0
        %1241 = vmatpush1.bf16.msra.mxu0 0
        %1242 = vmatprep.subr.bf16.mxu0 0
        %1243 = vmatpush1.bf16.msra.mxu0 0
        %1244 = vmatprep.subr.bf16.mxu0 0
        %1245 = vmatpush1.bf16.msra.mxu0 0
        %1246 = vmatprep.subr.bf16.mxu0 0
        %1247 = vmatpush1.bf16.msra.mxu0 0
        %1248 = vmatprep.subr.bf16.mxu0 0
        %1249 = vmatpush1.bf16.msra.mxu0 0
        %1250 = vmatprep.subr.bf16.mxu0 0
        %1251 = vmatpush1.bf16.msra.mxu0 0
        %1252 = vmatprep.subr.bf16.mxu0 0
        %1253 = vmatpush1.bf16.msra.mxu0 0
        %1254 = vmatprep.subr.bf16.mxu0 0
        %1255 = vmatpush1.bf16.msra.mxu0 0
        %1256 = vmatprep.subr.bf16.mxu0 0
        %1257 = vmatpush1.bf16.msra.mxu0 0
        %1258 = vmatprep.subr.bf16.mxu0 0
        %1259 = vmatpush1.bf16.msra.mxu0 0
        %1260 = vmatprep.subr.bf16.mxu0 0
        %1261 = vmatpush1.bf16.msra.mxu0 0
        %1262 = vmatprep.subr.bf16.mxu0 0
        %1263 = vmatpush1.bf16.msra.mxu0 0
        %1264 = vmatprep.mubr.bf16.mxu0 0
        %1265 = vmatmul.mubr.bf16.gmra.mrb[0].mxu0 %v1230
        %v1266 = vpop.f32.mrb[0].mxu0
        %v1267 = vadd.f32 0.0, %v1266
        %v1268 = vpop.f32.mrb[0].mxu0
        %v1269 = vpop.f32.mrb[0].mxu0
        %v1270 = vadd.f32 0.0, %v1269
        %v1271 = vpop.f32.mrb[0].mxu0
        %1272 = vdwg.mxu0
        %1273 = vrot.lane.b32.xlu0 %v501, 104
        %v1274 = vpop.permute.xlu0 %1273
        %1275 = vrot.lane.b32.xlu0 %v515, 72
        %v1276 = vpop.permute.xlu0 %1275
        %v1278 = vsel %vm534, %v1274, 0
        %v1281 = vsel %vm534, %v1276, 0
        %1283 = vmatprep.subr.bf16.mxu0 0
        %1284 = vmatpush1.bf16.xpose.msra.mxu0 %v1281
        %1285 = vmatprep.subr.bf16.mxu0 0
        %1286 = vmatpush1.bf16.xpose.msra.mxu0 0
        %1287 = vmatprep.subr.bf16.mxu0 0
        %1288 = vmatpush1.bf16.xpose.msra.mxu0 0
        %1289 = vmatprep.subr.bf16.mxu0 0
        %1290 = vmatpush1.bf16.xpose.msra.mxu0 0
        %1291 = vmatprep.subr.bf16.mxu0 0
        %1292 = vmatpush1.bf16.xpose.msra.mxu0 0
        %1293 = vmatprep.subr.bf16.mxu0 0
        %1294 = vmatpush1.bf16.xpose.msra.mxu0 0
        %1295 = vmatprep.subr.bf16.mxu0 0
        %1296 = vmatpush1.bf16.xpose.msra.mxu0 0
        %1297 = vmatprep.subr.bf16.mxu0 0
        %1298 = vmatpush1.bf16.xpose.msra.mxu0 0
        %1299 = vmatprep.subr.bf16.mxu0 0
        %1300 = vmatpush1.bf16.xpose.msra.mxu0 0
        %1301 = vmatprep.subr.bf16.mxu0 0
        %1302 = vmatpush1.bf16.xpose.msra.mxu0 0
        %1303 = vmatprep.subr.bf16.mxu0 0
        %1304 = vmatpush1.bf16.xpose.msra.mxu0 0
        %1305 = vmatprep.subr.bf16.mxu0 0
        %1306 = vmatpush1.bf16.xpose.msra.mxu0 0
        %1307 = vmatprep.subr.bf16.mxu0 0
        %1308 = vmatpush1.bf16.xpose.msra.mxu0 0
        %1309 = vmatprep.subr.bf16.mxu0 0
        %1310 = vmatpush1.bf16.xpose.msra.mxu0 0
        %1311 = vmatprep.subr.bf16.mxu0 0
        %1312 = vmatpush1.bf16.xpose.msra.mxu0 0
        %1313 = vmatprep.subr.bf16.mxu0 0
        %1314 = vmatpush1.bf16.xpose.msra.mxu0 0
        %1315 = vmatprep.mubr.bf16.mxu0 0
        %1316 = vmatmul.mubr.bf16.gmra.mrb[0].mxu0 %v1278
        %v1317 = vpop.f32.mrb[0].mxu0
        %v1318 = vadd.f32 0.0, %v1317
        %v1319 = vpop.f32.mrb[0].mxu0
        %v1320 = vpop.f32.mrb[0].mxu0
        %v1321 = vadd.f32 0.0, %v1320
        %v1322 = vpop.f32.mrb[0].mxu0
        %1323 = vdwg.mxu0
        %1324 = vrot.lane.b32.xlu0 %v502, 104
        %v1325 = vpop.permute.xlu0 %1324
        %1326 = vrot.lane.b32.xlu0 %v516, 72
        %v1327 = vpop.permute.xlu0 %1326
        %v1329 = vsel %vm534, %v1325, 0
        %v1332 = vsel %vm534, %v1327, 0
        %1334 = vmatprep.subr.bf16.mxu0 0
        %1335 = vmatpush1.bf16.xpose.msra.mxu0 %v1332
        %1336 = vmatprep.subr.bf16.mxu0 0
        %1337 = vmatpush1.bf16.xpose.msra.mxu0 0
        %1338 = vmatprep.subr.bf16.mxu0 0
        %1339 = vmatpush1.bf16.xpose.msra.mxu0 0
        %1340 = vmatprep.subr.bf16.mxu0 0
        %1341 = vmatpush1.bf16.xpose.msra.mxu0 0
        %1342 = vmatprep.subr.bf16.mxu0 0
        %1343 = vmatpush1.bf16.xpose.msra.mxu0 0
        %1344 = vmatprep.subr.bf16.mxu0 0
        %1345 = vmatpush1.bf16.xpose.msra.mxu0 0
        %1346 = vmatprep.subr.bf16.mxu0 0
        %1347 = vmatpush1.bf16.xpose.msra.mxu0 0
        %1348 = vmatprep.subr.bf16.mxu0 0
        %1349 = vmatpush1.bf16.xpose.msra.mxu0 0
        %1350 = vmatprep.subr.bf16.mxu0 0
        %1351 = vmatpush1.bf16.xpose.msra.mxu0 0
        %1352 = vmatprep.subr.bf16.mxu0 0
        %1353 = vmatpush1.bf16.xpose.msra.mxu0 0
        %1354 = vmatprep.subr.bf16.mxu0 0
        %1355 = vmatpush1.bf16.xpose.msra.mxu0 0
        %1356 = vmatprep.subr.bf16.mxu0 0
        %1357 = vmatpush1.bf16.xpose.msra.mxu0 0
        %1358 = vmatprep.subr.bf16.mxu0 0
        %1359 = vmatpush1.bf16.xpose.msra.mxu0 0
        %1360 = vmatprep.subr.bf16.mxu0 0
        %1361 = vmatpush1.bf16.xpose.msra.mxu0 0
        %1362 = vmatprep.subr.bf16.mxu0 0
        %1363 = vmatpush1.bf16.xpose.msra.mxu0 0
        %1364 = vmatprep.subr.bf16.mxu0 0
        %1365 = vmatpush1.bf16.xpose.msra.mxu0 0
        %1366 = vmatprep.mubr.bf16.mxu0 0
        %1367 = vmatmul.mubr.bf16.gmra.mrb[0].mxu0 %v1329
        %v1368 = vpop.f32.mrb[0].mxu0
        %v1369 = vadd.f32 0.0, %v1368
        %v1370 = vpop.f32.mrb[0].mxu0
        %v1371 = vpop.f32.mrb[0].mxu0
        %v1372 = vadd.f32 0.0, %v1371
        %v1373 = vpop.f32.mrb[0].mxu0
        %1374 = vdwg.mxu0
        %v1375 = vmul.f32 %v1318, 0.35355338
        %v1376 = vmul.f32 %v1321, 0.35355338
        %v1377 = vmul.f32 %v1369, 0.35355338
        %v1378 = vmul.f32 %v1372, 0.35355338
        %v1379 = vsel %vm636, %v1375, -inf
        %1380 = vmax.xlane.f32.xlu0 %v1379
        %v1381 = vpop.xlane.xlu0 %1380
        %v1382 = vsel %vm636, %v1376, -inf
        %1383 = vmax.xlane.f32.xlu0 %v1382
        %v1384 = vpop.xlane.xlu0 %1383
        %v1385 = vsel %vm636, %v1377, -inf
        %1386 = vmax.xlane.f32.xlu0 %v1385
        %v1387 = vpop.xlane.xlu0 %1386
        %v1388 = vsel %vm636, %v1378, -inf
        %1389 = vmax.xlane.f32.xlu0 %v1388
        %v1390 = vpop.xlane.xlu0 %1389
        %v1391 = vsub.f32 %v1375, %v1381
        %v1392 = vsub.f32 %v1376, %v1384
        %v1393 = vsub.f32 %v1377, %v1387
        %v1394 = vsub.f32 %v1378, %v1390
        %v1395 = vmul.f32 %v1391, 1.442695
        %v1396 = vpow.pop %v1395
        %v1397 = vmul.f32 %v1392, 1.442695
        %v1398 = vpow.pop %v1397
        %v1399 = vmul.f32 %v1393, 1.442695
        %v1400 = vpow.pop %v1399
        %v1401 = vmul.f32 %v1394, 1.442695
        %v1402 = vpow.pop %v1401
        %v1403 = vsel %vm636, %v1396, 0.0
        %1404 = vadd.xlane.f32.xlu0 %v1403
        %v1405 = vpop.xlane.xlu0 %1404
        %v1406 = vsel %vm636, %v1398, 0.0
        %1407 = vadd.xlane.f32.xlu0 %v1406
        %v1408 = vpop.xlane.xlu0 %1407
        %v1409 = vsel %vm636, %v1400, 0.0
        %1410 = vadd.xlane.f32.xlu0 %v1409
        %v1411 = vpop.xlane.xlu0 %1410
        %v1412 = vsel %vm636, %v1402, 0.0
        %1413 = vadd.xlane.f32.xlu0 %v1412
        %v1414 = vpop.xlane.xlu0 %1413
        %v1415 = vrcp.pop %v1405
        %v1416 = vrcp.pop %v1408
        %v1417 = vrcp.pop %v1411
        %v1418 = vrcp.pop %v1414
        %v1419 = vmul.f32 %v1396, %v1415
        %v1420 = vmul.f32 %v1398, %v1416
        %v1421 = vmul.f32 %v1400, %v1417
        %v1422 = vmul.f32 %v1402, %v1418
        %v1423 = vpack.c.bf16 %v1420, %v1419
        %v1424 = vpack.c.bf16 %v1422, %v1421
        %1425 = vrot.lane.b32.xlu0 %v529, 40
        %v1426 = vpop.permute.xlu0 %1425
        %v1429 = vsel %vm636, %v1423, 0
        %1431 = vmatprep.subr.bf16.mxu0 0
        %1432 = vmatpush1.bf16.msra.mxu0 %v1426
        %1433 = vmatprep.subr.bf16.mxu0 0
        %1434 = vmatpush1.bf16.msra.mxu0 0
        %1435 = vmatprep.subr.bf16.mxu0 0
        %1436 = vmatpush1.bf16.msra.mxu0 0
        %1437 = vmatprep.subr.bf16.mxu0 0
        %1438 = vmatpush1.bf16.msra.mxu0 0
        %1439 = vmatprep.subr.bf16.mxu0 0
        %1440 = vmatpush1.bf16.msra.mxu0 0
        %1441 = vmatprep.subr.bf16.mxu0 0
        %1442 = vmatpush1.bf16.msra.mxu0 0
        %1443 = vmatprep.subr.bf16.mxu0 0
        %1444 = vmatpush1.bf16.msra.mxu0 0
        %1445 = vmatprep.subr.bf16.mxu0 0
        %1446 = vmatpush1.bf16.msra.mxu0 0
        %1447 = vmatprep.subr.bf16.mxu0 0
        %1448 = vmatpush1.bf16.msra.mxu0 0
        %1449 = vmatprep.subr.bf16.mxu0 0
        %1450 = vmatpush1.bf16.msra.mxu0 0
        %1451 = vmatprep.subr.bf16.mxu0 0
        %1452 = vmatpush1.bf16.msra.mxu0 0
        %1453 = vmatprep.subr.bf16.mxu0 0
        %1454 = vmatpush1.bf16.msra.mxu0 0
        %1455 = vmatprep.subr.bf16.mxu0 0
        %1456 = vmatpush1.bf16.msra.mxu0 0
        %1457 = vmatprep.subr.bf16.mxu0 0
        %1458 = vmatpush1.bf16.msra.mxu0 0
        %1459 = vmatprep.subr.bf16.mxu0 0
        %1460 = vmatpush1.bf16.msra.mxu0 0
        %1461 = vmatprep.subr.bf16.mxu0 0
        %1462 = vmatpush1.bf16.msra.mxu0 0
        %1463 = vmatprep.mubr.bf16.mxu0 0
        %1464 = vmatmul.mubr.bf16.gmra.mrb[0].mxu0 %v1429
        %v1465 = vpop.f32.mrb[0].mxu0
        %v1466 = vadd.f32 0.0, %v1465
        %v1467 = vpop.f32.mrb[0].mxu0
        %v1468 = vpop.f32.mrb[0].mxu0
        %v1469 = vadd.f32 0.0, %v1468
        %v1470 = vpop.f32.mrb[0].mxu0
        %1471 = vdwg.mxu0
        %1472 = vrot.lane.b32.xlu0 %v530, 40
        %v1473 = vpop.permute.xlu0 %1472
        %v1476 = vsel %vm636, %v1424, 0
        %1478 = vmatprep.subr.bf16.mxu0 0
        %1479 = vmatpush1.bf16.msra.mxu0 %v1473
        %1480 = vmatprep.subr.bf16.mxu0 0
        %1481 = vmatpush1.bf16.msra.mxu0 0
        %1482 = vmatprep.subr.bf16.mxu0 0
        %1483 = vmatpush1.bf16.msra.mxu0 0
        %1484 = vmatprep.subr.bf16.mxu0 0
        %1485 = vmatpush1.bf16.msra.mxu0 0
        %1486 = vmatprep.subr.bf16.mxu0 0
        %1487 = vmatpush1.bf16.msra.mxu0 0
        %1488 = vmatprep.subr.bf16.mxu0 0
        %1489 = vmatpush1.bf16.msra.mxu0 0
        %1490 = vmatprep.subr.bf16.mxu0 0
        %1491 = vmatpush1.bf16.msra.mxu0 0
        %1492 = vmatprep.subr.bf16.mxu0 0
        %1493 = vmatpush1.bf16.msra.mxu0 0
        %1494 = vmatprep.subr.bf16.mxu0 0
        %1495 = vmatpush1.bf16.msra.mxu0 0
        %1496 = vmatprep.subr.bf16.mxu0 0
        %1497 = vmatpush1.bf16.msra.mxu0 0
        %1498 = vmatprep.subr.bf16.mxu0 0
        %1499 = vmatpush1.bf16.msra.mxu0 0
        %1500 = vmatprep.subr.bf16.mxu0 0
        %1501 = vmatpush1.bf16.msra.mxu0 0
        %1502 = vmatprep.subr.bf16.mxu0 0
        %1503 = vmatpush1.bf16.msra.mxu0 0
        %1504 = vmatprep.subr.bf16.mxu0 0
        %1505 = vmatpush1.bf16.msra.mxu0 0
        %1506 = vmatprep.subr.bf16.mxu0 0
        %1507 = vmatpush1.bf16.msra.mxu0 0
        %1508 = vmatprep.subr.bf16.mxu0 0
        %1509 = vmatpush1.bf16.msra.mxu0 0
        %1510 = vmatprep.mubr.bf16.mxu0 0
        %1511 = vmatmul.mubr.bf16.gmra.mrb[0].mxu0 %v1476
        %v1512 = vpop.f32.mrb[0].mxu0
        %v1513 = vadd.f32 0.0, %v1512
        %v1514 = vpop.f32.mrb[0].mxu0
        %v1515 = vpop.f32.mrb[0].mxu0
        %v1516 = vadd.f32 0.0, %v1515
        %v1517 = vpop.f32.mrb[0].mxu0
        %1518 = vdwg.mxu0
        %1523 = vrot.lane.b32.xlu0 %v974, 8
        %v1524 = vpop.permute.xlu0 %1523
        %1525 = vrot.lane.b32.xlu0 %v977, 8
        %v1526 = vpop.permute.xlu0 %1525
        %1527 = vrot.lane.b32.xlu0 %v1021, 8
        %v1528 = vpop.permute.xlu0 %1527
        %1529 = vrot.lane.b32.xlu0 %v1024, 8
        %v1530 = vpop.permute.xlu0 %1529
        %1539 = vrot.lane.b32.xlu0 %v1220, 16
        %v1540 = vpop.permute.xlu0 %1539
        %1541 = vrot.lane.b32.xlu0 %v1223, 16
        %v1542 = vpop.permute.xlu0 %1541
        %1543 = vrot.lane.b32.xlu0 %v1267, 16
        %v1544 = vpop.permute.xlu0 %1543
        %1545 = vrot.lane.b32.xlu0 %v1270, 16
        %v1546 = vpop.permute.xlu0 %1545
        %1555 = vrot.lane.b32.xlu0 %v1466, 24
        %v1556 = vpop.permute.xlu0 %1555
        %1557 = vrot.lane.b32.xlu0 %v1469, 24
        %v1558 = vpop.permute.xlu0 %1557
        %1559 = vrot.lane.b32.xlu0 %v1513, 24
        %v1560 = vpop.permute.xlu0 %1559
        %1561 = vrot.lane.b32.xlu0 %v1516, 24
        %v1562 = vpop.permute.xlu0 %1561
        %v1567 = vsel %vm534, %v725, %v1524
        %v1568 = vsel %vm534, %v728, %v1526
        %v1569 = vsel %vm534, %v773, %v1528
        %v1570 = vsel %vm534, %v776, %v1530
        %v1571 = vsel %vm636, %v1567, %v1540
        %v1572 = vsel %vm636, %v1568, %v1542
        %v1573 = vsel %vm636, %v1569, %v1544
        %v1574 = vsel %vm636, %v1570, %v1546
        %vm1575 = vcmask 195584
        %v1576 = vsel %vm1575, %v1571, %v1556
        %v1577 = vsel %vm1575, %v1572, %v1558
        %v1578 = vsel %vm1575, %v1573, %v1560
        %v1579 = vsel %vm1575, %v1574, %v1562
        %v1580 = vpack.c.bf16 %v1577, %v1576
        %v1581 = vpack.c.bf16 %v1579, %v1578
        %v1582 = vld [vmem:[%s390] sm:$0xf]
        %v1583 = vld [vmem:[%s390 + $0x4] sm:$0xf]
        %v1584 = vld [vmem:[%s390 + $0x8] sm:$0xf]
        %v1585 = vld [vmem:[%s390 + $0xc] sm:$0xf]
        %v1586 = vlaneseq
        %v1587 = vshrl.u32 %v1586, 7
        %v1588 = vsub.s32 3, %v1587
        %v1589 = vrot.slane %v419, %v1588
        %v1594 = vunpack.c.l.b16 %v1582
        %v1595 = vunpack.c.l.b16 %v1583
        %v1596 = vunpack.c.l.b16 %v1584
        %v1597 = vunpack.c.l.b16 %v1585
        %v1598 = vpack.c.b16 %v1595, %v1594
        %v1599 = vpack.c.b16 %v1597, %v1596
        %v1603 = vsel %vm437, %v1580, 0
        %v1606 = vsel %vm437, %v1581, 0
        %1608 = vmatprep.subr.bf16.mxu0 0
        %1609 = vmatpush1.bf16.msra.mxu0 %v1598
        %1610 = vmatprep.subr.bf16.mxu0 0
        %1611 = vmatpush1.bf16.msra.mxu0 %v1599
        %1612 = vmatprep.subr.bf16.mxu0 0
        %1613 = vmatpush1.bf16.msra.mxu0 0
        %1614 = vmatprep.subr.bf16.mxu0 0
        %1615 = vmatpush1.bf16.msra.mxu0 0
        %1616 = vmatprep.subr.bf16.mxu0 0
        %1617 = vmatpush1.bf16.msra.mxu0 0
        %1618 = vmatprep.subr.bf16.mxu0 0
        %1619 = vmatpush1.bf16.msra.mxu0 0
        %1620 = vmatprep.subr.bf16.mxu0 0
        %1621 = vmatpush1.bf16.msra.mxu0 0
        %1622 = vmatprep.subr.bf16.mxu0 0
        %1623 = vmatpush1.bf16.msra.mxu0 0
        %1624 = vmatprep.subr.bf16.mxu0 0
        %1625 = vmatpush1.bf16.msra.mxu0 0
        %1626 = vmatprep.subr.bf16.mxu0 0
        %1627 = vmatpush1.bf16.msra.mxu0 0
        %1628 = vmatprep.subr.bf16.mxu0 0
        %1629 = vmatpush1.bf16.msra.mxu0 0
        %1630 = vmatprep.subr.bf16.mxu0 0
        %1631 = vmatpush1.bf16.msra.mxu0 0
        %1632 = vmatprep.subr.bf16.mxu0 0
        %1633 = vmatpush1.bf16.msra.mxu0 0
        %1634 = vmatprep.subr.bf16.mxu0 0
        %1635 = vmatpush1.bf16.msra.mxu0 0
        %1636 = vmatprep.subr.bf16.mxu0 0
        %1637 = vmatpush1.bf16.msra.mxu0 0
        %1638 = vmatprep.subr.bf16.mxu0 0
        %1639 = vmatpush1.bf16.msra.mxu0 0
        %1640 = vmatprep.mubr.bf16.mxu0 0
        %1641 = vmatmul.mubr.bf16.gmra.mrb[0].mxu0 %v1603
        %v1642 = vpop.f32.mrb[0].mxu0
        %v1643 = vadd.f32 %v1589, %v1642
        %v1644 = vpop.f32.mrb[0].mxu0
        %v1645 = vpop.f32.mrb[0].mxu0
        %v1646 = vadd.f32 %v1589, %v1645
        %v1647 = vpop.f32.mrb[0].mxu0
        %1648 = vmatprep.mubr.bf16.mxu0 0
        %1649 = vmatmul.mubr.bf16.gmra.mrb[0].mxu0 %v1606
        %v1650 = vpop.f32.mrb[0].mxu0
        %v1651 = vadd.f32 %v1589, %v1650
        %v1652 = vpop.f32.mrb[0].mxu0
        %v1653 = vpop.f32.mrb[0].mxu0
        %v1654 = vadd.f32 %v1589, %v1653
        %v1655 = vpop.f32.mrb[0].mxu0
        %1656 = vdwg.mxu0
        %v1657 = vadd.f32 %v413, %v1643
        %v1658 = vadd.f32 %v414, %v1646
        %v1659 = vadd.f32 %v415, %v1651
        %v1660 = vadd.f32 %v416, %v1654
        %v1661 = vsel %vm437, %v1657, 0.0
        %v1662 = vsel %vm437, %v1658, 0.0
        %v1663 = vadd.f32 %v1661, %v1662
        %v1664 = vsel %vm437, %v1659, 0.0
        %v1665 = vadd.f32 %v1663, %v1664
        %v1666 = vsel %vm437, %v1660, 0.0
        %v1667 = vadd.f32 %v1665, %v1666
        %v1668 = vrot.slane %v1667, 4
        %v1669 = vadd.f32 %v1667, %v1668
        %v1670 = vrot.slane %v1669, 2
        %v1671 = vadd.f32 %v1669, %v1670
        %v1672 = vrot.slane %v1671, 1
        %v1673 = vadd.f32 %v1671, %v1672
        %v1674 = vrcp.pop 32.0
        %v1675 = vmul.f32 %v1673, %v1674
        %v1676 = vsub.f32 %v1657, %v1675
        %v1677 = vsub.f32 %v1658, %v1675
        %v1678 = vsub.f32 %v1659, %v1675
        %v1679 = vsub.f32 %v1660, %v1675
        %v1680 = vmul.f32 %v1676, %v1676
        %v1681 = vmul.f32 %v1677, %v1677
        %v1682 = vmul.f32 %v1678, %v1678
        %v1683 = vmul.f32 %v1679, %v1679
        %v1684 = vsel %vm437, %v1680, 0.0
        %v1685 = vsel %vm437, %v1681, 0.0
        %v1686 = vadd.f32 %v1684, %v1685
        %v1687 = vsel %vm437, %v1682, 0.0
        %v1688 = vadd.f32 %v1686, %v1687
        %v1689 = vsel %vm437, %v1683, 0.0
        %v1690 = vadd.f32 %v1688, %v1689
        %v1691 = vrot.slane %v1690, 4
        %v1692 = vadd.f32 %v1690, %v1691
        %v1693 = vrot.slane %v1692, 2
        %v1694 = vadd.f32 %v1692, %v1693
        %v1695 = vrot.slane %v1694, 1
        %v1696 = vadd.f32 %v1694, %v1695
        %v1697 = vmul.f32 %v1696, %v1674
        %v1698 = vadd.f32 %v1697, 1e-05
        %v1699 = vrsqrt.pop %v1698
        %v1700 = vmul.f32 %v1676, %v1699
        %v1701 = vmul.f32 %v1677, %v1699
        %v1702 = vmul.f32 %v1678, %v1699
        %v1703 = vmul.f32 %v1679, %v1699
        %v1704 = vlaneseq
        %v1705 = vshrl.u32 %v1704, 7
        %v1706 = vsub.s32 4, %v1705
        %v1707 = vrot.slane %v419, %v1706
        %v1708 = vmul.f32 %v1700, %v1707
        %v1709 = vmul.f32 %v1701, %v1707
        %v1710 = vmul.f32 %v1702, %v1707
        %v1711 = vmul.f32 %v1703, %v1707
        %v1712 = vlaneseq
        %v1713 = vshrl.u32 %v1712, 7
        %v1714 = vsub.s32 5, %v1713
        %v1715 = vrot.slane %v419, %v1714
        %v1716 = vadd.f32 %v1708, %v1715
        %v1717 = vadd.f32 %v1709, %v1715
        %v1718 = vadd.f32 %v1710, %v1715
        %v1719 = vadd.f32 %v1711, %v1715
        %v1720 = vpack.c.bf16 %v1717, %v1716
        %v1721 = vpack.c.bf16 %v1719, %v1718
        %v1722 = vld [vmem:[%s323] sm:$0xf]
        %v1723 = vld [vmem:[%s323 + $0x4] sm:$0xf]
        %v1724 = vld [vmem:[%s323 + $0x8] sm:$0xf]
        %v1725 = vld [vmem:[%s323 + $0xc] sm:$0xf]
        %v1726 = vld [vmem:[%s398] sm:$0x1]
        %v1728 = vlaneseq
        %v1729 = vshrl.u32 %v1728, 7
        %v1730 = vsub.s32 0, %v1729
        %v1731 = vrot.slane %v1726, %v1730
        %v1737 = vunpack.c.l.b16 %v1722
        %v1738 = vunpack.c.l.b16 %v1723
        %v1739 = vunpack.c.l.b16 %v1724
        %v1740 = vunpack.c.l.b16 %v1725
        %v1741 = vpack.c.b16 %v1738, %v1737
        %v1742 = vpack.c.b16 %v1740, %v1739
        %v1746 = vsel %vm437, %v1720, 0
        %v1749 = vsel %vm437, %v1721, 0
        %1751 = vmatprep.subr.bf16.mxu0 0
        %1752 = vmatpush1.bf16.msra.mxu0 %v1741
        %1753 = vmatprep.subr.bf16.mxu0 0
        %1754 = vmatpush1.bf16.msra.mxu0 %v1742
        %1755 = vmatprep.subr.bf16.mxu0 0
        %1756 = vmatpush1.bf16.msra.mxu0 0
        %1757 = vmatprep.subr.bf16.mxu0 0
        %1758 = vmatpush1.bf16.msra.mxu0 0
        %1759 = vmatprep.subr.bf16.mxu0 0
        %1760 = vmatpush1.bf16.msra.mxu0 0
        %1761 = vmatprep.subr.bf16.mxu0 0
        %1762 = vmatpush1.bf16.msra.mxu0 0
        %1763 = vmatprep.subr.bf16.mxu0 0
        %1764 = vmatpush1.bf16.msra.mxu0 0
        %1765 = vmatprep.subr.bf16.mxu0 0
        %1766 = vmatpush1.bf16.msra.mxu0 0
        %1767 = vmatprep.subr.bf16.mxu0 0
        %1768 = vmatpush1.bf16.msra.mxu0 0
        %1769 = vmatprep.subr.bf16.mxu0 0
        %1770 = vmatpush1.bf16.msra.mxu0 0
        %1771 = vmatprep.subr.bf16.mxu0 0
        %1772 = vmatpush1.bf16.msra.mxu0 0
        %1773 = vmatprep.subr.bf16.mxu0 0
        %1774 = vmatpush1.bf16.msra.mxu0 0
        %1775 = vmatprep.subr.bf16.mxu0 0
        %1776 = vmatpush1.bf16.msra.mxu0 0
        %1777 = vmatprep.subr.bf16.mxu0 0
        %1778 = vmatpush1.bf16.msra.mxu0 0
        %1779 = vmatprep.subr.bf16.mxu0 0
        %1780 = vmatpush1.bf16.msra.mxu0 0
        %1781 = vmatprep.subr.bf16.mxu0 0
        %1782 = vmatpush1.bf16.msra.mxu0 0
        %1783 = vmatprep.mubr.bf16.mxu0 0
        %1784 = vmatmul.mubr.bf16.gmra.mrb[0].mxu0 %v1746
        %v1785 = vpop.f32.mrb[0].mxu0
        %v1786 = vadd.f32 %v1731, %v1785
        %v1787 = vpop.f32.mrb[0].mxu0
        %v1788 = vpop.f32.mrb[0].mxu0
        %v1789 = vadd.f32 %v1731, %v1788
        %v1790 = vpop.f32.mrb[0].mxu0
        %1791 = vmatprep.mubr.bf16.mxu0 0
        %1792 = vmatmul.mubr.bf16.gmra.mrb[0].mxu0 %v1749
        %v1793 = vpop.f32.mrb[0].mxu0
        %v1794 = vadd.f32 %v1731, %v1793
        %v1795 = vpop.f32.mrb[0].mxu0
        %v1796 = vpop.f32.mrb[0].mxu0
        %v1797 = vadd.f32 %v1731, %v1796
        %v1798 = vpop.f32.mrb[0].mxu0
        %1799 = vdwg.mxu0
        %v1800 = vmul.f32 %v1786, 0.5
        %v1801 = vmul.f32 %v1789, 0.5
        %v1802 = vmul.f32 %v1794, 0.5
        %v1803 = vmul.f32 %v1797, 0.5
        %v1804 = vmul.f32 %v1786, 0.70710677
        %v1805 = vmul.f32 %v1789, 0.70710677
        %v1806 = vmul.f32 %v1794, 0.70710677
        %v1807 = vmul.f32 %v1797, 0.70710677
        %v1808 = verf.f32.pop %v1804
        %v1809 = verf.f32.pop %v1805
        %v1810 = verf.f32.pop %v1806
        %v1811 = verf.f32.pop %v1807
        %v1812 = vadd.f32 %v1808, 1.0
        %v1813 = vadd.f32 %v1809, 1.0
        %v1814 = vadd.f32 %v1810, 1.0
        %v1815 = vadd.f32 %v1811, 1.0
        %v1816 = vmul.f32 %v1800, %v1812
        %v1817 = vmul.f32 %v1801, %v1813
        %v1818 = vmul.f32 %v1802, %v1814
        %v1819 = vmul.f32 %v1803, %v1815
        %v1820 = vpack.c.bf16 %v1817, %v1816
        %v1821 = vpack.c.bf16 %v1819, %v1818
        %v1822 = vld [vmem:[%s395] sm:$0xf]
        %v1823 = vld [vmem:[%s395 + $0x4] sm:$0xf]
        %v1824 = vld [vmem:[%s395 + $0x8] sm:$0xf]
        %v1825 = vld [vmem:[%s395 + $0xc] sm:$0xf]
        %v1826 = vld [vmem:[%s395 + $0x10] sm:$0xf]
        %v1827 = vld [vmem:[%s395 + $0x14] sm:$0xf]
        %v1828 = vld [vmem:[%s395 + $0x18] sm:$0xf]
        %v1829 = vld [vmem:[%s395 + $0x1c] sm:$0xf]
        %v1830 = vlaneseq
        %v1831 = vshrl.u32 %v1830, 7
        %v1832 = vsub.s32 6, %v1831
        %v1833 = vrot.slane %v419, %v1832
        %v1842 = vunpack.c.l.b16 %v1822
        %v1843 = vunpack.c.l.b16 %v1823
        %v1844 = vunpack.c.l.b16 %v1824
        %v1845 = vunpack.c.l.b16 %v1825
        %v1846 = vunpack.c.l.b16 %v1826
        %v1847 = vunpack.c.l.b16 %v1827
        %v1848 = vunpack.c.l.b16 %v1828
        %v1849 = vunpack.c.l.b16 %v1829
        %v1850 = vpack.c.b16 %v1843, %v1842
        %v1851 = vpack.c.b16 %v1845, %v1844
        %v1852 = vpack.c.b16 %v1847, %v1846
        %v1853 = vpack.c.b16 %v1849, %v1848
        %vm1858 = vcmask 523264
        %v1860 = vsel %vm1858, %v1820, 0
        %v1863 = vsel %vm1858, %v1821, 0
        %1865 = vmatprep.subr.bf16.mxu0 0
        %1866 = vmatpush1.bf16.msra.mxu0 %v1850
        %1867 = vmatprep.subr.bf16.mxu0 0
        %1868 = vmatpush1.bf16.msra.mxu0 %v1851
        %1869 = vmatprep.subr.bf16.mxu0 0
        %1870 = vmatpush1.bf16.msra.mxu0 %v1852
        %1871 = vmatprep.subr.bf16.mxu0 0
        %1872 = vmatpush1.bf16.msra.mxu0 %v1853
        %1873 = vmatprep.subr.bf16.mxu0 0
        %1874 = vmatpush1.bf16.msra.mxu0 0
        %1875 = vmatprep.subr.bf16.mxu0 0
        %1876 = vmatpush1.bf16.msra.mxu0 0
        %1877 = vmatprep.subr.bf16.mxu0 0
        %1878 = vmatpush1.bf16.msra.mxu0 0
        %1879 = vmatprep.subr.bf16.mxu0 0
        %1880 = vmatpush1.bf16.msra.mxu0 0
        %1881 = vmatprep.subr.bf16.mxu0 0
        %1882 = vmatpush1.bf16.msra.mxu0 0
        %1883 = vmatprep.subr.bf16.mxu0 0
        %1884 = vmatpush1.bf16.msra.mxu0 0
        %1885 = vmatprep.subr.bf16.mxu0 0
        %1886 = vmatpush1.bf16.msra.mxu0 0
        %1887 = vmatprep.subr.bf16.mxu0 0
        %1888 = vmatpush1.bf16.msra.mxu0 0
        %1889 = vmatprep.subr.bf16.mxu0 0
        %1890 = vmatpush1.bf16.msra.mxu0 0
        %1891 = vmatprep.subr.bf16.mxu0 0
        %1892 = vmatpush1.bf16.msra.mxu0 0
        %1893 = vmatprep.subr.bf16.mxu0 0
        %1894 = vmatpush1.bf16.msra.mxu0 0
        %1895 = vmatprep.subr.bf16.mxu0 0
        %1896 = vmatpush1.bf16.msra.mxu0 0
        %1897 = vmatprep.mubr.bf16.mxu0 0
        %1898 = vmatmul.mubr.bf16.gmra.mrb[0].mxu0 %v1860
        %v1899 = vpop.f32.mrb[0].mxu0
        %v1900 = vadd.f32 %v1833, %v1899
        %v1901 = vpop.f32.mrb[0].mxu0
        %v1902 = vpop.f32.mrb[0].mxu0
        %v1903 = vadd.f32 %v1833, %v1902
        %v1904 = vpop.f32.mrb[0].mxu0
        %1905 = vmatprep.mubr.bf16.mxu0 0
        %1906 = vmatmul.mubr.bf16.gmra.mrb[0].mxu0 %v1863
        %v1907 = vpop.f32.mrb[0].mxu0
        %v1908 = vadd.f32 %v1833, %v1907
        %v1909 = vpop.f32.mrb[0].mxu0
        %v1910 = vpop.f32.mrb[0].mxu0
        %v1911 = vadd.f32 %v1833, %v1910
        %v1912 = vpop.f32.mrb[0].mxu0
        %1913 = vdwg.mxu0
        %v1914 = vadd.f32 %v1716, %v1900
        %v1915 = vadd.f32 %v1717, %v1903
        %v1916 = vadd.f32 %v1718, %v1908
        %v1917 = vadd.f32 %v1719, %v1911
        %v1918 = vsel %vm437, %v1914, 0.0
        %v1919 = vsel %vm437, %v1915, 0.0
        %v1920 = vadd.f32 %v1918, %v1919
        %v1921 = vsel %vm437, %v1916, 0.0
        %v1922 = vadd.f32 %v1920, %v1921
        %v1923 = vsel %vm437, %v1917, 0.0
        %v1924 = vadd.f32 %v1922, %v1923
        %v1925 = vrot.slane %v1924, 4
        %v1926 = vadd.f32 %v1924, %v1925
        %v1927 = vrot.slane %v1926, 2
        %v1928 = vadd.f32 %v1926, %v1927
        %v1929 = vrot.slane %v1928, 1
        %v1930 = vadd.f32 %v1928, %v1929
        %v1931 = vmul.f32 %v1930, %v1674
        %v1932 = vsub.f32 %v1914, %v1931
        %v1933 = vsub.f32 %v1915, %v1931
        %v1934 = vsub.f32 %v1916, %v1931
        %v1935 = vsub.f32 %v1917, %v1931
        %v1936 = vmul.f32 %v1932, %v1932
        %v1937 = vmul.f32 %v1933, %v1933
        %v1938 = vmul.f32 %v1934, %v1934
        %v1939 = vmul.f32 %v1935, %v1935
        %v1940 = vsel %vm437, %v1936, 0.0
        %v1941 = vsel %vm437, %v1937, 0.0
        %v1942 = vadd.f32 %v1940, %v1941
        %v1943 = vsel %vm437, %v1938, 0.0
        %v1944 = vadd.f32 %v1942, %v1943
        %v1945 = vsel %vm437, %v1939, 0.0
        %v1946 = vadd.f32 %v1944, %v1945
        %v1947 = vrot.slane %v1946, 4
        %v1948 = vadd.f32 %v1946, %v1947
        %v1949 = vrot.slane %v1948, 2
        %v1950 = vadd.f32 %v1948, %v1949
        %v1951 = vrot.slane %v1950, 1
        %v1952 = vadd.f32 %v1950, %v1951
        %v1953 = vmul.f32 %v1952, %v1674
        %v1954 = vadd.f32 %v1953, 1e-05
        %v1955 = vrsqrt.pop %v1954
        %v1956 = vmul.f32 %v1932, %v1955
        %v1957 = vmul.f32 %v1933, %v1955
        %v1958 = vmul.f32 %v1934, %v1955
        %v1959 = vmul.f32 %v1935, %v1955
        %v1960 = vlaneseq
        %v1961 = vshrl.u32 %v1960, 7
        %v1962 = vsub.s32 7, %v1961
        %v1963 = vrot.slane %v419, %v1962
        %v1964 = vmul.f32 %v1956, %v1963
        %v1965 = vmul.f32 %v1957, %v1963
        %v1966 = vmul.f32 %v1958, %v1963
        %v1967 = vmul.f32 %v1959, %v1963
        %v1968 = vlaneseq
        %v1969 = vshrl.u32 %v1968, 7
        %v1970 = vsub.s32 0, %v1969
        %v1971 = vrot.slane %v420, %v1970
        %v1972 = vadd.f32 %v1964, %v1971
        %v1973 = vadd.f32 %v1965, %v1971
        %v1974 = vadd.f32 %v1966, %v1971
        %v1975 = vadd.f32 %v1967, %v1971
        %1976 = vst.msk [vmem:[#allocation7] sm:$0xff] %vm437, %v1972
        %1977 = vst.msk [vmem:[#allocation7 + $0x8] sm:$0xff] %vm437, %v1973
        %1978 = vst.msk [vmem:[#allocation7 + $0x10] sm:$0xff] %vm437, %v1974
        %1979 = vst.msk [vmem:[#allocation7 + $0x18] sm:$0xff] %vm437, %v1975
        // Predicated region
        $region61: #{tpu_custom_call.1} parent=47 // pred_check
          %p1980 = pneg %p215
        $region62: #{tpu_custom_call.1} parent=47 // pred_check_branch
          %1982 = sbr.rel (%p1980) target = $region64
        $region63: #{tpu_custom_call.1} parent=47 // pred_region
          %s1984 = ssub.s32 512, 512
          %1985 = vsyncadd [#allocation4], %s1984
          %s1986 = sshll.u32 [#allocation7], 4
          %s1987 = int_to_ptr.vmem [resolvable:$true] %s1986
          %1992 = dma.vmem_to_hbm [thread:$0]  %s1987, 512, %s7, [#allocation4], 128, 128, 8
        $region64: #{tpu_custom_call.1} parent=47 // pred_fallthru
          _
        // Predicated region
        $region65: #{tpu_custom_call.1} parent=47 // pred_check
          %p1993 = pneg %p215
        $region66: #{tpu_custom_call.1} parent=47 // pred_check_branch
          %1995 = sbr.rel (%p1993) target = $region68
        $region67: #{tpu_custom_call.1} parent=47 // pred_region
          %1996 = dma.done [#allocation4], 512
        $region68: #{tpu_custom_call.1} parent=47 // pred_fallthru
          _
      $region48: #{tpu_custom_call.1} parent=5 // pred_fallthru
        _
      %p1997 = scmp.le.s32.totalorder 2, %s20
      // Predicated region
      $region69: #{tpu_custom_call.1} parent=5 // pred_check
        %p1998 = pneg %p1997
      $region70: #{tpu_custom_call.1} parent=5 // pred_check_branch
        %2000 = sbr.rel (%p1998) target = $region72
      $region71: #{tpu_custom_call.1} parent=5 // pred_region
        %s2001 = ssub.s32 %s20, 2
      $region72: #{tpu_custom_call.1} parent=5 // pred_fallthru
        _
    $region6: #{tpu_custom_call.1} parent=1 // loop_footer
      %s24 = sadd.s32 1, %s20
    $region7: #{tpu_custom_call.1} parent=1 // loop_footer_branch
      %19 = sbr.rel target = $region3
    $region8: #{tpu_custom_call.1} parent=1 // loop_exit
      _
    %2002 = vsyncpa [#allocation3], 1
    %s2003 = scalar_lea.sflag [#allocation3], 1
    %2004 = vsyncpa %s2003, 1
    %2005 = vsyncpa [#allocation6], 1
    %s2006 = scalar_lea.sflag [#allocation6], 1
    %2007 = vsyncpa %s2006, 1
    %2008 = vsyncpa [#allocation4], 1
    %s2009 = scalar_lea.sflag [#allocation4], 1
    %2010 = vsyncpa %s2009, 1

</llo_original>
